<compile_context>
chip_gen: v7x
topology: tpu7x:2x2x1
jax: 0.10.0
libtpu: 0.0.40
codegen_flags: <defaults>
</compile_context>

<pallas_src>
import math
import functools
import numpy as np
import jax
import jax.numpy as jnp
from jax import lax
from jax.experimental import pallas as pl
from jax.experimental.pallas import tpu as pltpu

NUM_HEADS = 4
LANE = 128        # TPU lane width; hidden dim is padded to a multiple of this


def _round_up(a, b):
    return -(-a // b) * b


# --------------------------------------------------------------------------
# Hardware introspection (safe fallbacks everywhere).
# --------------------------------------------------------------------------
@functools.lru_cache(maxsize=None)
def _vmem_bytes():
    """Physical VMEM per core, or None if undetectable."""
    try:
        v = getattr(pltpu.get_tpu_info(), "vmem_capacity_bytes", None)
        if v:
            return int(v)
    except Exception:
        pass
    return None


@functools.lru_cache(maxsize=None)
def _tensorcores_per_device():
    """#TensorCores a 'parallel' grid axis can be sharded over (1 on v5e/v6e)."""
    try:
        info = pltpu.get_tpu_info()
        for name in ("num_cores", "core_count", "num_tensorcores",
                     "tensorcore_count"):
            v = getattr(info, name, None)
            if isinstance(v, int) and v > 0:
                return v
    except Exception:
        pass
    try:
        kind = jax.devices()[0].device_kind.lower()
        if any(s in kind for s in ("v4", "v5p", "v7")):
            return 2          # megacore / dual-TC parts
    except Exception:
        pass
    return 1                  # v5e / v6e: single TensorCore


def _compiler_params(sem):
    kw = dict(dimension_semantics=sem)
    vm = _vmem_bytes()
    if vm:  # only raise the scoped-VMEM limit when we actually know capacity
        kw["vmem_limit_bytes"] = min(vm // 2, 64 << 20)
    return pltpu.CompilerParams(**kw)


# --------------------------------------------------------------------------
# GRU recurrence kernel.
#   grid = (batch_chunks [parallel], time_chunks [arbitrary, sequential])
#   Per grid step: the raw x chunk (Nb, Tc, Din) is in VMEM; each timestep
#   projects it (fused input projection), runs the fused r/u hidden matmul
#   plus the candidate matmul, and stores h directly in (N, T, H) order.
#   The hidden state lives in VMEM scratch and persists across time chunks.
# --------------------------------------------------------------------------
def _gru_kernel(x_ref, h0_ref, wx_ref, bx_ref, wru_ref, wc_ref, out_ref, h_scr):
    Tc = x_ref.shape[1]
    Hp = wc_ref.shape[0]

    @pl.when(pl.program_id(1) == 0)
    def _():
        h_scr[...] = h0_ref[...]

    h = h_scr[...]
    bx = bx_ref[...]                       # (1, 3Hp) -- hoisted out of the loop

    # Static unroll over the time chunk (Tc <= 32): all indices are static, so
    # loads/stores stay aligned, and LLO can schedule across steps.
    # TODO(synk): for very large Nb*Hp use a fori_loop with partial unroll to
    # bound live ranges / register pressure.
    for t in range(Tc):
        # Fused input projection for this timestep (previously a separate
        # pallas_call whose result round-tripped HBM).
        xp = jnp.dot(x_ref[:, t, :], wx_ref[...],
                     preferred_element_type=jnp.float32) + bx        # (Nb, 3Hp)
        ru = jax.nn.sigmoid(
            jnp.dot(h, wru_ref[...], preferred_element_type=jnp.float32)
            + xp[:, :2 * Hp])                                         # (Nb, 2Hp)
        r = ru[:, :Hp]
        u = ru[:, Hp:]
        c = jnp.tanh(
            jnp.dot(r * h, wc_ref[...], preferred_element_type=jnp.float32)
            + xp[:, 2 * Hp:])
        h = h + u * (c - h)          # == u*c + (1-u)*h, one VPU mul fewer
        out_ref[:, t, :] = h         # direct (N, T, H)-ordered, lane-dense store
    h_scr[...] = h


def _pick_time_chunk(Nb, Din, Hp, vmem_bytes):
    """Largest Tc in {32,16,8} whose working set fits ~1/4 of VMEM."""
    budget = vmem_bytes // 4
    for tc in (32, 16, 8):
        need = 4 * (2 * Nb * tc * (Din + Hp)              # dbl-buffered x + out
                    + 2 * (Din * 3 * Hp + 3 * Hp * Hp)    # weight slabs
                    + Nb * Hp)                            # h scratch
        if need <= budget:
            return tc
    return 8


def gru_sequence(x_rank, h0, gru_params, time_chunk=None):
    """x_rank: (N, T, Din), h0: (N, H) -> hiddens (N, T, H)."""
    N, T, Din = x_rank.shape
    H = h0.shape[1]
    (r_whh, r_wxh, r_b), (u_whh, u_wxh, u_b), (c_whh, c_wxh, c_b) = gru_params

    # Lane-dense hidden dim: pad H -> Hp (multiple of 128).  Padded lanes see
    # zero weights/bias/h0, so they stay exactly 0 and never contaminate the
    # real lanes; they are sliced away at the end.
    Hp = _round_up(H, LANE)
    ph = Hp - H

    def pad_cols(w):                     # (?, H) -> (?, Hp)
        return jnp.pad(w, ((0, 0), (0, ph)))

    def pad_both(w):                     # (H, H) -> (Hp, Hp)
        return jnp.pad(w, ((0, ph), (0, ph)))

    w_x = jnp.concatenate([pad_cols(r_wxh), pad_cols(u_wxh), pad_cols(c_wxh)],
                          axis=1)                                    # (Din, 3Hp)
    b_x = jnp.concatenate([pad_cols(r_b), pad_cols(u_b), pad_cols(c_b)],
                          axis=1)                                    # (1, 3Hp)
    w_h_ru = jnp.concatenate([pad_both(r_whh), pad_both(u_whh)], axis=1)  # (Hp, 2Hp)
    w_h_c = pad_both(c_whh)                                          # (Hp, Hp)
    # TODO(synk): on v6e/v7x the weight slabs could be cast to bf16 (keeping
    # preferred_element_type=f32) to halve resident VMEM; kept f32 here so the
    # kernel tracks the f32 reference tightly.
    h0p = jnp.pad(h0, ((0, 0), (0, ph)))                             # (N, Hp)

    # Batch split only on parts with >1 TensorCore (v7x / megacore).  On
    # single-TC chips (v5e, v6e) the split would just halve the matmul M-dim
    # and double the grid-step overhead for zero parallelism gain.
    cores = _tensorcores_per_device()
    if cores > 1 and N % (8 * cores) == 0:
        Nb = N // cores
    else:
        Nb = N
    n_b = N // Nb

    vmem = _vmem_bytes() or (64 << 20)   # conservative default if unknown
    if time_chunk is None:
        time_chunk = _pick_time_chunk(Nb, Din, Hp, vmem)
    if T <= time_chunk:
        Tc, T_pad = T, T
        x_in = x_rank
    else:
        Tc = time_chunk
        T_pad = _round_up(T, Tc)
        # Padded tail timesteps run on zero inputs; their outputs are sliced
        # away and the final h is never exported, so this is harmless.
        x_in = jnp.pad(x_rank, ((0, 0), (0, T_pad - T), (0, 0)))
    n_t = T_pad // Tc

    out = pl.pallas_call(
        _gru_kernel,
        out_shape=jax.ShapeDtypeStruct((N, T_pad, Hp), jnp.float32),
        grid_spec=pltpu.PrefetchScalarGridSpec(
            num_scalar_prefetch=0,
            grid=(n_b, n_t),   # time axis innermost/sequential: h carry is valid
            in_specs=[pl.BlockSpec((Nb, Tc, Din), lambda b, t: (b, t, 0)),
                      pl.BlockSpec((Nb, Hp), lambda b, t: (b, 0)),
                      pl.BlockSpec((Din, 3 * Hp), lambda b, t: (0, 0)),
                      pl.BlockSpec((1, 3 * Hp), lambda b, t: (0, 0)),
                      pl.BlockSpec((Hp, 2 * Hp), lambda b, t: (0, 0)),
                      pl.BlockSpec((Hp, Hp), lambda b, t: (0, 0))],
            out_specs=pl.BlockSpec((Nb, Tc, Hp), lambda b, t: (b, t, 0)),
            scratch_shapes=[pltpu.VMEM((Nb, Hp), jnp.float32)]),
        compiler_params=_compiler_params(("parallel", "arbitrary")),
    )(x_in, h0p, w_x, b_x, w_h_ru, w_h_c)
    return out[:, :T, :H]


# --------------------------------------------------------------------------
# Collapsed single-key attention.
#   The module always calls MultiheadAttention with a key/value sequence of
#   length 1 per rank, so softmax over the key axis is identically 1 and the
#   output is (kv @ Wv + bv) @ Wo + bo, independent of the query.  That affine
#   chain is folded into ONE matmul with host-precomputed fused weights.
# --------------------------------------------------------------------------
def _attn_kernel(x_ref, w_ref, b_ref, o_ref):
    o_ref[...] = (jnp.dot(x_ref[...], w_ref[...],
                          preferred_element_type=jnp.float32) + b_ref[...])


def attn_single_key(kv, attn_params, block_rows=None):
    """kv: (B, R, H) -> per-(batch, rank) attention output (B, R, H)."""
    wq, wk, wv, bq, bk, bv, wo, bo = attn_params   # wq/wk/bq/bk mathematically dead
    hi = jax.lax.Precision.HIGHEST
    w_fused = jnp.dot(wv, wo, precision=hi)        # (H, H)
    b_fused = jnp.dot(bv, wo, precision=hi) + bo   # (1, H)

    B, R, H = kv.shape
    M = B * R
    x = kv.reshape(M, H)
    if block_rows is None:
        vmem = _vmem_bytes() or (64 << 20)
        block_rows = 1024 if vmem >= (96 << 20) else 512
    if M <= block_rows:
        Rm, M_pad = M, M
    else:
        Rm = block_rows
        M_pad = _round_up(M, Rm)
        x = jnp.pad(x, ((0, M_pad - M), (0, 0)))
    out = pl.pallas_call(
        _attn_kernel,
        out_shape=jax.ShapeDtypeStruct((M_pad, H), jnp.float32),
        grid_spec=pltpu.PrefetchScalarGridSpec(
            num_scalar_prefetch=0,
            grid=(M_pad // Rm,),
            in_specs=[pl.BlockSpec((Rm, H), lambda i: (i, 0)),
                      pl.BlockSpec((H, H), lambda i: (0, 0)),
                      pl.BlockSpec((1, H), lambda i: (0, 0))],
            out_specs=pl.BlockSpec((Rm, H), lambda i: (i, 0))),
        compiler_params=_compiler_params(("parallel",)),
    )(x, w_fused, b_fused)
    return out[:M].reshape(B, R, H)


# --------------------------------------------------------------------------
# Parameter init (deterministic, mirrors shapes of the PyTorch __init__)
# --------------------------------------------------------------------------
def xavier_uniform(key, shape):
    bound = math.sqrt(6.0 / (shape[0] + shape[1]))
    return jax.random.uniform(key, shape, jnp.float32, -bound, bound)


def init_params(key, input_dim, hidden_dim):
    keys = jax.random.split(key, 10)

    def gate(k1, k2):
        whh = xavier_uniform(k1, (hidden_dim, hidden_dim))
        wxh = xavier_uniform(k2, (input_dim, hidden_dim))
        b = jnp.zeros((1, hidden_dim), jnp.float32)
        return (whh, wxh, b)

    gru_params = [gate(keys[0], keys[1]),   # relevance
                  gate(keys[2], keys[3]),   # update
                  gate(keys[4], keys[5])]   # candidate

    wq = xavier_uniform(keys[6], (hidden_dim, hidden_dim))
    wk = xavier_uniform(keys[7], (hidden_dim, hidden_dim))
    wv = xavier_uniform(keys[8], (hidden_dim, hidden_dim))
    wo = xavier_uniform(keys[9], (hidden_dim, hidden_dim))
    bq = jnp.zeros((1, hidden_dim), jnp.float32)
    bk = jnp.zeros((1, hidden_dim), jnp.float32)
    bv = jnp.zeros((1, hidden_dim), jnp.float32)
    bo = jnp.zeros((1, hidden_dim), jnp.float32)
    attn_params = (wq, wk, wv, bq, bk, bv, wo, bo)
    return gru_params, attn_params


# --------------------------------------------------------------------------
# Full forward (process_whole_sequence=True branch)
# --------------------------------------------------------------------------
def gru_cell_forward(gru_params, attn_params, hidden_dim,
                     x, x_rank, incidence_dense, he_features, rank_mask,
                     batch_size, h=None):
    N = x.shape[0]
    if h is None:
        h = jnp.zeros((N, hidden_dim), jnp.float32)

    # --- GRU recurrence over the sequence (Pallas kernel) ---
    output_hiddens = gru_sequence(x_rank, h, gru_params)      # (N, T, H)

    # --- degenerate single-key attention (Pallas kernel) ---
    # he_features feed only the query, and the single-key softmax makes the
    # output independent of the query, so he_features never affect the values.
    kv = output_hiddens[:batch_size]                          # (B, R, H), T == R
    vo_np = np.asarray(attn_single_key(kv, attn_params))      # (B, R, H)

    # TODO(synk): ragged incidence/rank grouping, boolean-mask gather and
    # argsort reordering have data-dependent shapes; they stay host-side
    # Python/NumPy glue exactly mirroring the torch module's Python loops.
    inc = np.asarray(incidence_dense)
    rm = np.asarray(rank_mask)
    R = rm.shape[0]
    results, he_order = [], []
    for i in range(batch_size):
        he_x_i = np.where(inc[i] != 0)[0]
        per_rank = []
        for j in range(R):
            sel = he_x_i[np.where(rm[j, he_x_i] == 1)[0]]
            per_rank.append([int(e) for e in sel])
        max_l = max(len(l) for l in per_rank)
        if max_l == 0:
            print(i)   # mirrors the degenerate-q branch of the torch module
            continue
        rows, order = [], []
        for j in range(R):
            for e in per_rank[j]:
                rows.append(j)
                order.append(e)
        results.append(vo_np[i, np.array(rows)])
        he_order.append(order)

    current_n = 0
    he_final_order = []
    for order in he_order:
        he_final_order.extend((np.argsort(np.asarray(order)) + current_n).tolist())
        current_n += len(order)

    return (jnp.asarray(np.concatenate(results, axis=0)),
            jnp.asarray(np.array(he_final_order, np.int32)))


# --------------------------------------------------------------------------
# Pure-JAX references (HIGHEST-precision matmuls) for sanity checks
# --------------------------------------------------------------------------
def gru_reference(x_rank, h0, gru_params):
    hi = jax.lax.Precision.HIGHEST
    (r_whh, r_wxh, r_b), (u_whh, u_wxh, u_b), (c_whh, c_wxh, c_b) = gru_params
    h = h0
    outs = []
    for i in range(x_rank.shape[1]):
        xi = x_rank[:, i]
        r = jax.nn.sigmoid(jnp.dot(h, r_whh, precision=hi)
                           + jnp.dot(xi, r_wxh, precision=hi) + r_b)
        u = jax.nn.sigmoid(jnp.dot(h, u_whh, precision=hi)
                           + jnp.dot(xi, u_wxh, precision=hi) + u_b)
        c = jnp.tanh(jnp.dot(r * h, c_whh, precision=hi)
                     + jnp.dot(xi, c_wxh, precision=hi) + c_b)
        h = u * c + (1 - u) * h
        outs.append(h[:, None])
    return jnp.concatenate(outs, axis=1)


def mha_reference(q, kv, attn_params):
    """Full multi-head attention with a length-1 key/value sequence."""
    hi = jax.lax.Precision.HIGHEST
    wq, wk, wv, bq, bk, bv, wo, bo = attn_params
    B, R, L, H = q.shape
    hd = H // NUM_HEADS
    qh = (jnp.dot(q, wq, precision=hi) + bq).reshape(B, R, L, NUM_HEADS, hd)
    kh = (jnp.dot(kv, wk, precision=hi) + bk).reshape(B, R, 1, NUM_HEADS, hd)
    vh = (jnp.dot(kv, wv, precision=hi) + bv).reshape(B, R, 1, NUM_HEADS, hd)
    s = jnp.einsum('brlnd,brsnd->brnls', qh, kh, precision=hi) / math.sqrt(hd)
    w = jax.nn.softmax(s, axis=-1)                 # softmax over length-1 key axis
    oh = jnp.einsum('brnls,brsnd->brlnd', w, vh, precision=hi)
    return jnp.dot(oh.reshape(B, R, L, H), wo, precision=hi) + bo


if __name__ == "__main__":
    key = jax.random.PRNGKey(0)
    N, Din, H, T, E = 8, 16, 32, 4, 10     # T == number of ranks (required by the module)
    batch_size = N

    k_param, k_x, k_xr, k_he, k_q, k_xr2 = jax.random.split(key, 6)
    gru_params, attn_params = init_params(k_param, Din, H)

    x = jax.random.normal(k_x, (N, Din), jnp.float32)
    x_rank = jax.random.normal(k_xr, (N, T, Din), jnp.float32)
    he_features = jax.random.normal(k_he, (E, H), jnp.float32)

    inc = np.zeros((N, E), np.float32)
    for i in range(N):
        for e in range(E):
            if (e % N == i) or ((e + i) % 3 == 0):
                inc[i, e] = 1.0
    rank_mask = np.zeros((T, E), np.float32)
    for e in range(E):
        rank_mask[e % T, e] = 1.0

    res, he_final_order = gru_cell_forward(
        gru_params, attn_params, H,
        x, x_rank, jnp.asarray(inc), he_features, jnp.asarray(rank_mask), batch_size)
    jax.block_until_ready(res)
    jax.block_until_ready(he_final_order)

    # --- sanity checks ---
    # Tolerance tightened 5x vs the previous 5e-2; kept at 1e-2 headroom
    # because MXU f32 pass decomposition and EUP transcendental approximations
    # differ slightly from the XLA HIGHEST-precision reference across
    # TPU generations.
    TOL = 1e-2
    h0 = jnp.zeros((N, H), jnp.float32)
    hid_kernel = gru_sequence(x_rank, h0, gru_params)          # (N, T, H)
    hid_ref = gru_reference(x_rank, h0, gru_params)
    np.testing.assert_allclose(np.asarray(hid_kernel), np.asarray(hid_ref),
                               rtol=TOL, atol=TOL)

    # multi-time-chunk path (T > time_chunk) exercises the cross-chunk h carry
    T2 = 24
    x_rank2 = jax.random.normal(k_xr2, (N, T2, Din), jnp.float32)
    np.testing.assert_allclose(
        np.asarray(gru_sequence(x_rank2, h0, gru_params, time_chunk=16)),
        np.asarray(gru_reference(x_rank2, h0, gru_params)),
        rtol=TOL, atol=TOL)

    # collapsed single-key attention == full MHA with a length-1 key sequence
    vo = attn_single_key(hid_kernel, attn_params)              # (N, T, H)
    Lmax = 3
    q_test = jax.random.normal(k_q, (N, T, Lmax, H), jnp.float32)
    mha_full = mha_reference(q_test, hid_kernel, attn_params)  # (N, T, Lmax, H)
    np.testing.assert_allclose(
        np.asarray(jnp.broadcast_to(vo[:, :, None, :], mha_full.shape)),
        np.asarray(mha_full), rtol=TOL, atol=TOL)

    assert np.all(np.isfinite(np.asarray(res)))
    assert res.shape[1] == H
    assert res.shape[0] == int(he_final_order.shape[0])
    print("KERNEL_OK")
</pallas_src>

<mosaic_0001>
module attributes {stable_mosaic.version = 11 : i64} {
  func.func @_gru_kernel(%arg0: i32, %arg1: i32, %arg2: memref<8x4x16xf32, #tpu.memory_space<vmem>>, %arg3: memref<8x128xf32, #tpu.memory_space<vmem>>, %arg4: memref<16x384xf32, #tpu.memory_space<vmem>>, %arg5: memref<1x384xf32, #tpu.memory_space<vmem>>, %arg6: memref<128x256xf32, #tpu.memory_space<vmem>>, %arg7: memref<128x128xf32, #tpu.memory_space<vmem>>, %arg8: memref<8x4x128xf32, #tpu.memory_space<vmem>>, %arg9: memref<8x128xf32, #tpu.memory_space<vmem>>) attributes {dimension_semantics = [#tpu.dimension_semantics<parallel>, #tpu.dimension_semantics<arbitrary>], iteration_bounds = array<i64: 1, 1>, scalar_prefetch = 0 : i64, scratch_operands = 1 : i64, tpu.core_type = #tpu.core_type<tc>, window_params = [{transform_indices = @transform_0, window_bounds = array<i64: 8, 4, 16>}, {transform_indices = @transform_1, window_bounds = array<i64: 8, 128>}, {pipeline_mode = #tpu.pipeline_mode<synchronous>, transform_indices = @transform_2, window_bounds = array<i64: 16, 384>}, {pipeline_mode = #tpu.pipeline_mode<synchronous>, transform_indices = @transform_3, window_bounds = array<i64: 1, 384>}, {pipeline_mode = #tpu.pipeline_mode<synchronous>, transform_indices = @transform_4, window_bounds = array<i64: 128, 256>}, {pipeline_mode = #tpu.pipeline_mode<synchronous>, transform_indices = @transform_5, window_bounds = array<i64: 128, 128>}, {transform_indices = @transform_6, window_bounds = array<i64: 8, 4, 128>}]} {
    %c0_i32 = arith.constant 0 : i32
    %0 = arith.cmpi eq, %arg1, %c0_i32 : i32
    %1 = arith.extui %0 : i1 to i32
    %c0_i32_0 = arith.constant 0 : i32
    %2 = arith.cmpi ne, %1, %c0_i32_0 : i32
    scf.if %2 {
      %c0_66 = arith.constant 0 : index
      %c0_67 = arith.constant 0 : index
      %122 = vector.load %arg3[%c0_66, %c0_67] : memref<8x128xf32, #tpu.memory_space<vmem>>, vector<8x128xf32>
      %c0_68 = arith.constant 0 : index
      %c0_69 = arith.constant 0 : index
      %123 = vector.load %arg9[%c0_68, %c0_69] : memref<8x128xf32, #tpu.memory_space<vmem>>, vector<8x128xf32>
      tpu.vector_store %arg9[%c0_68, %c0_69], %122 {strides = array<i32>} : memref<8x128xf32, #tpu.memory_space<vmem>>, vector<8x128xf32>,
    } else {
    }
    %c0 = arith.constant 0 : index
    %c0_1 = arith.constant 0 : index
    %3 = vector.load %arg9[%c0, %c0_1] : memref<8x128xf32, #tpu.memory_space<vmem>>, vector<8x128xf32>
    %c0_2 = arith.constant 0 : index
    %c0_3 = arith.constant 0 : index
    %4 = vector.load %arg5[%c0_2, %c0_3] : memref<1x384xf32, #tpu.memory_space<vmem>>, vector<1x384xf32>
    %c0_4 = arith.constant 0 : index
    %c0_5 = arith.constant 0 : index
    %c0_6 = arith.constant 0 : index
    %5 = vector.load %arg2[%c0_4, %c0_5, %c0_6] : memref<8x4x16xf32, #tpu.memory_space<vmem>>, vector<8x1x16xf32>
    %6 = vector.shape_cast %5 : vector<8x1x16xf32> to vector<8x16xf32>
    %c0_7 = arith.constant 0 : index
    %c0_8 = arith.constant 0 : index
    %7 = vector.load %arg4[%c0_7, %c0_8] : memref<16x384xf32, #tpu.memory_space<vmem>>, vector<16x384xf32>
    %cst = arith.constant dense<0.000000e+00> : vector<8x384xf32>
    %8 = tpu.matmul %6, %7, %cst {dimension_numbers = #tpu.dot_dimension_numbers<[1], [0], [0], [1], [0, 0, 1, 1], [], []>} : vector<8x16xf32>, vector<16x384xf32>, vector<8x384xf32> -> vector<8x384xf32>
    %9 = vector.broadcast %4 : vector<1x384xf32> to vector<8x384xf32>
    %10 = arith.addf %8, %9 : vector<8x384xf32>
    %c0_9 = arith.constant 0 : index
    %c0_10 = arith.constant 0 : index
    %11 = vector.load %arg6[%c0_9, %c0_10] : memref<128x256xf32, #tpu.memory_space<vmem>>, vector<128x256xf32>
    %cst_11 = arith.constant dense<0.000000e+00> : vector<8x256xf32>
    %12 = tpu.matmul %3, %11, %cst_11 {dimension_numbers = #tpu.dot_dimension_numbers<[1], [0], [0], [1], [0, 0, 1, 1], [], []>} : vector<8x128xf32>, vector<128x256xf32>, vector<8x256xf32> -> vector<8x256xf32>
    %13 = vector.extract_strided_slice %10 {offsets = [0, 0], sizes = [8, 256], strides = [1, 1]} : vector<8x384xf32> to vector<8x256xf32>
    %14 = arith.addf %12, %13 : vector<8x256xf32>
    %15 = arith.negf %14 : vector<8x256xf32>
    %16 = math.exp %15 : vector<8x256xf32>
    %cst_12 = arith.constant 1.000000e+00 : f32
    %17 = vector.broadcast %cst_12 : f32 to vector<8x256xf32>
    %18 = arith.addf %17, %16 : vector<8x256xf32>
    %19 = arith.divf %17, %18 : vector<8x256xf32>
    %20 = vector.extract_strided_slice %19 {offsets = [0, 0], sizes = [8, 128], strides = [1, 1]} : vector<8x256xf32> to vector<8x128xf32>
    %21 = vector.extract_strided_slice %19 {offsets = [0, 128], sizes = [8, 128], strides = [1, 1]} : vector<8x256xf32> to vector<8x128xf32>
    %22 = arith.mulf %20, %3 : vector<8x128xf32>
    %c0_13 = arith.constant 0 : index
    %c0_14 = arith.constant 0 : index
    %23 = vector.load %arg7[%c0_13, %c0_14] : memref<128x128xf32, #tpu.memory_space<vmem>>, vector<128x128xf32>
    %cst_15 = arith.constant dense<0.000000e+00> : vector<8x128xf32>
    %24 = tpu.matmul %22, %23, %cst_15 {dimension_numbers = #tpu.dot_dimension_numbers<[1], [0], [0], [1], [0, 0, 1, 1], [], []>} : vector<8x128xf32>, vector<128x128xf32>, vector<8x128xf32> -> vector<8x128xf32>
    %25 = vector.extract_strided_slice %10 {offsets = [0, 256], sizes = [8, 128], strides = [1, 1]} : vector<8x384xf32> to vector<8x128xf32>
    %26 = arith.addf %24, %25 : vector<8x128xf32>
    %27 = math.tanh %26 : vector<8x128xf32>
    %28 = arith.subf %27, %3 : vector<8x128xf32>
    %29 = arith.mulf %21, %28 : vector<8x128xf32>
    %30 = arith.addf %3, %29 : vector<8x128xf32>
    %c0_16 = arith.constant 0 : index
    %c0_17 = arith.constant 0 : index
    %c0_18 = arith.constant 0 : index
    %31 = vector.load %arg8[%c0_16, %c0_17, %c0_18] : memref<8x4x128xf32, #tpu.memory_space<vmem>>, vector<8x1x128xf32>
    %32 = vector.shape_cast %31 : vector<8x1x128xf32> to vector<8x128xf32>
    %33 = vector.shape_cast %30 : vector<8x128xf32> to vector<8x1x128xf32>
    tpu.vector_store %arg8[%c0_16, %c0_17, %c0_18], %33 {strides = array<i32>} : memref<8x4x128xf32, #tpu.memory_space<vmem>>, vector<8x1x128xf32>,
    %c0_19 = arith.constant 0 : index
    %c1 = arith.constant 1 : index
    %c0_20 = arith.constant 0 : index
    %34 = vector.load %arg2[%c0_19, %c1, %c0_20] : memref<8x4x16xf32, #tpu.memory_space<vmem>>, vector<8x1x16xf32>
    %35 = vector.shape_cast %34 : vector<8x1x16xf32> to vector<8x16xf32>
    %c0_21 = arith.constant 0 : index
    %c0_22 = arith.constant 0 : index
    %36 = vector.load %arg4[%c0_21, %c0_22] : memref<16x384xf32, #tpu.memory_space<vmem>>, vector<16x384xf32>
    %cst_23 = arith.constant dense<0.000000e+00> : vector<8x384xf32>
    %37 = tpu.matmul %35, %36, %cst_23 {dimension_numbers = #tpu.dot_dimension_numbers<[1], [0], [0], [1], [0, 0, 1, 1], [], []>} : vector<8x16xf32>, vector<16x384xf32>, vector<8x384xf32> -> vector<8x384xf32>
    %38 = vector.broadcast %4 : vector<1x384xf32> to vector<8x384xf32>
    %39 = arith.addf %37, %38 : vector<8x384xf32>
    %c0_24 = arith.constant 0 : index
    %c0_25 = arith.constant 0 : index
    %40 = vector.load %arg6[%c0_24, %c0_25] : memref<128x256xf32, #tpu.memory_space<vmem>>, vector<128x256xf32>
    %cst_26 = arith.constant dense<0.000000e+00> : vector<8x256xf32>
    %41 = tpu.matmul %30, %40, %cst_26 {dimension_numbers = #tpu.dot_dimension_numbers<[1], [0], [0], [1], [0, 0, 1, 1], [], []>} : vector<8x128xf32>, vector<128x256xf32>, vector<8x256xf32> -> vector<8x256xf32>
    %42 = vector.extract_strided_slice %39 {offsets = [0, 0], sizes = [8, 256], strides = [1, 1]} : vector<8x384xf32> to vector<8x256xf32>
    %43 = arith.addf %41, %42 : vector<8x256xf32>
    %44 = arith.negf %43 : vector<8x256xf32>
    %45 = math.exp %44 : vector<8x256xf32>
    %cst_27 = arith.constant 1.000000e+00 : f32
    %46 = vector.broadcast %cst_27 : f32 to vector<8x256xf32>
    %47 = arith.addf %46, %45 : vector<8x256xf32>
    %48 = arith.divf %46, %47 : vector<8x256xf32>
    %49 = vector.extract_strided_slice %48 {offsets = [0, 0], sizes = [8, 128], strides = [1, 1]} : vector<8x256xf32> to vector<8x128xf32>
    %50 = vector.extract_strided_slice %48 {offsets = [0, 128], sizes = [8, 128], strides = [1, 1]} : vector<8x256xf32> to vector<8x128xf32>
    %51 = arith.mulf %49, %30 : vector<8x128xf32>
    %c0_28 = arith.constant 0 : index
    %c0_29 = arith.constant 0 : index
    %52 = vector.load %arg7[%c0_28, %c0_29] : memref<128x128xf32, #tpu.memory_space<vmem>>, vector<128x128xf32>
    %cst_30 = arith.constant dense<0.000000e+00> : vector<8x128xf32>
    %53 = tpu.matmul %51, %52, %cst_30 {dimension_numbers = #tpu.dot_dimension_numbers<[1], [0], [0], [1], [0, 0, 1, 1], [], []>} : vector<8x128xf32>, vector<128x128xf32>, vector<8x128xf32> -> vector<8x128xf32>
    %54 = vector.extract_strided_slice %39 {offsets = [0, 256], sizes = [8, 128], strides = [1, 1]} : vector<8x384xf32> to vector<8x128xf32>
    %55 = arith.addf %53, %54 : vector<8x128xf32>
    %56 = math.tanh %55 : vector<8x128xf32>
    %57 = arith.subf %56, %30 : vector<8x128xf32>
    %58 = arith.mulf %50, %57 : vector<8x128xf32>
    %59 = arith.addf %30, %58 : vector<8x128xf32>
    %c0_31 = arith.constant 0 : index
    %c1_32 = arith.constant 1 : index
    %c0_33 = arith.constant 0 : index
    %60 = vector.load %arg8[%c0_31, %c1_32, %c0_33] : memref<8x4x128xf32, #tpu.memory_space<vmem>>, vector<8x1x128xf32>
    %61 = vector.shape_cast %60 : vector<8x1x128xf32> to vector<8x128xf32>
    %62 = vector.shape_cast %59 : vector<8x128xf32> to vector<8x1x128xf32>
    tpu.vector_store %arg8[%c0_31, %c1_32, %c0_33], %62 {strides = array<i32>} : memref<8x4x128xf32, #tpu.memory_space<vmem>>, vector<8x1x128xf32>,
    %c0_34 = arith.constant 0 : index
    %c2 = arith.constant 2 : index
    %c0_35 = arith.constant 0 : index
    %63 = vector.load %arg2[%c0_34, %c2, %c0_35] : memref<8x4x16xf32, #tpu.memory_space<vmem>>, vector<8x1x16xf32>
    %64 = vector.shape_cast %63 : vector<8x1x16xf32> to vector<8x16xf32>
    %c0_36 = arith.constant 0 : index
    %c0_37 = arith.constant 0 : index
    %65 = vector.load %arg4[%c0_36, %c0_37] : memref<16x384xf32, #tpu.memory_space<vmem>>, vector<16x384xf32>
    %cst_38 = arith.constant dense<0.000000e+00> : vector<8x384xf32>
    %66 = tpu.matmul %64, %65, %cst_38 {dimension_numbers = #tpu.dot_dimension_numbers<[1], [0], [0], [1], [0, 0, 1, 1], [], []>} : vector<8x16xf32>, vector<16x384xf32>, vector<8x384xf32> -> vector<8x384xf32>
    %67 = vector.broadcast %4 : vector<1x384xf32> to vector<8x384xf32>
    %68 = arith.addf %66, %67 : vector<8x384xf32>
    %c0_39 = arith.constant 0 : index
    %c0_40 = arith.constant 0 : index
    %69 = vector.load %arg6[%c0_39, %c0_40] : memref<128x256xf32, #tpu.memory_space<vmem>>, vector<128x256xf32>
    %cst_41 = arith.constant dense<0.000000e+00> : vector<8x256xf32>
    %70 = tpu.matmul %59, %69, %cst_41 {dimension_numbers = #tpu.dot_dimension_numbers<[1], [0], [0], [1], [0, 0, 1, 1], [], []>} : vector<8x128xf32>, vector<128x256xf32>, vector<8x256xf32> -> vector<8x256xf32>
    %71 = vector.extract_strided_slice %68 {offsets = [0, 0], sizes = [8, 256], strides = [1, 1]} : vector<8x384xf32> to vector<8x256xf32>
    %72 = arith.addf %70, %71 : vector<8x256xf32>
    %73 = arith.negf %72 : vector<8x256xf32>
    %74 = math.exp %73 : vector<8x256xf32>
    %cst_42 = arith.constant 1.000000e+00 : f32
    %75 = vector.broadcast %cst_42 : f32 to vector<8x256xf32>
    %76 = arith.addf %75, %74 : vector<8x256xf32>
    %77 = arith.divf %75, %76 : vector<8x256xf32>
    %78 = vector.extract_strided_slice %77 {offsets = [0, 0], sizes = [8, 128], strides = [1, 1]} : vector<8x256xf32> to vector<8x128xf32>
    %79 = vector.extract_strided_slice %77 {offsets = [0, 128], sizes = [8, 128], strides = [1, 1]} : vector<8x256xf32> to vector<8x128xf32>
    %80 = arith.mulf %78, %59 : vector<8x128xf32>
    %c0_43 = arith.constant 0 : index
    %c0_44 = arith.constant 0 : index
    %81 = vector.load %arg7[%c0_43, %c0_44] : memref<128x128xf32, #tpu.memory_space<vmem>>, vector<128x128xf32>
    %cst_45 = arith.constant dense<0.000000e+00> : vector<8x128xf32>
    %82 = tpu.matmul %80, %81, %cst_45 {dimension_numbers = #tpu.dot_dimension_numbers<[1], [0], [0], [1], [0, 0, 1, 1], [], []>} : vector<8x128xf32>, vector<128x128xf32>, vector<8x128xf32> -> vector<8x128xf32>
    %83 = vector.extract_strided_slice %68 {offsets = [0, 256], sizes = [8, 128], strides = [1, 1]} : vector<8x384xf32> to vector<8x128xf32>
    %84 = arith.addf %82, %83 : vector<8x128xf32>
    %85 = math.tanh %84 : vector<8x128xf32>
    %86 = arith.subf %85, %59 : vector<8x128xf32>
    %87 = arith.mulf %79, %86 : vector<8x128xf32>
    %88 = arith.addf %59, %87 : vector<8x128xf32>
    %c0_46 = arith.constant 0 : index
    %c2_47 = arith.constant 2 : index
    %c0_48 = arith.constant 0 : index
    %89 = vector.load %arg8[%c0_46, %c2_47, %c0_48] : memref<8x4x128xf32, #tpu.memory_space<vmem>>, vector<8x1x128xf32>
    %90 = vector.shape_cast %89 : vector<8x1x128xf32> to vector<8x128xf32>
    %91 = vector.shape_cast %88 : vector<8x128xf32> to vector<8x1x128xf32>
    tpu.vector_store %arg8[%c0_46, %c2_47, %c0_48], %91 {strides = array<i32>} : memref<8x4x128xf32, #tpu.memory_space<vmem>>, vector<8x1x128xf32>,
    %c0_49 = arith.constant 0 : index
    %c3 = arith.constant 3 : index
    %c0_50 = arith.constant 0 : index
    %92 = vector.load %arg2[%c0_49, %c3, %c0_50] : memref<8x4x16xf32, #tpu.memory_space<vmem>>, vector<8x1x16xf32>
    %93 = vector.shape_cast %92 : vector<8x1x16xf32> to vector<8x16xf32>
    %c0_51 = arith.constant 0 : index
    %c0_52 = arith.constant 0 : index
    %94 = vector.load %arg4[%c0_51, %c0_52] : memref<16x384xf32, #tpu.memory_space<vmem>>, vector<16x384xf32>
    %cst_53 = arith.constant dense<0.000000e+00> : vector<8x384xf32>
    %95 = tpu.matmul %93, %94, %cst_53 {dimension_numbers = #tpu.dot_dimension_numbers<[1], [0], [0], [1], [0, 0, 1, 1], [], []>} : vector<8x16xf32>, vector<16x384xf32>, vector<8x384xf32> -> vector<8x384xf32>
    %96 = vector.broadcast %4 : vector<1x384xf32> to vector<8x384xf32>
    %97 = arith.addf %95, %96 : vector<8x384xf32>
    %c0_54 = arith.constant 0 : index
    %c0_55 = arith.constant 0 : index
    %98 = vector.load %arg6[%c0_54, %c0_55] : memref<128x256xf32, #tpu.memory_space<vmem>>, vector<128x256xf32>
    %cst_56 = arith.constant dense<0.000000e+00> : vector<8x256xf32>
    %99 = tpu.matmul %88, %98, %cst_56 {dimension_numbers = #tpu.dot_dimension_numbers<[1], [0], [0], [1], [0, 0, 1, 1], [], []>} : vector<8x128xf32>, vector<128x256xf32>, vector<8x256xf32> -> vector<8x256xf32>
    %100 = vector.extract_strided_slice %97 {offsets = [0, 0], sizes = [8, 256], strides = [1, 1]} : vector<8x384xf32> to vector<8x256xf32>
    %101 = arith.addf %99, %100 : vector<8x256xf32>
    %102 = arith.negf %101 : vector<8x256xf32>
    %103 = math.exp %102 : vector<8x256xf32>
    %cst_57 = arith.constant 1.000000e+00 : f32
    %104 = vector.broadcast %cst_57 : f32 to vector<8x256xf32>
    %105 = arith.addf %104, %103 : vector<8x256xf32>
    %106 = arith.divf %104, %105 : vector<8x256xf32>
    %107 = vector.extract_strided_slice %106 {offsets = [0, 0], sizes = [8, 128], strides = [1, 1]} : vector<8x256xf32> to vector<8x128xf32>
    %108 = vector.extract_strided_slice %106 {offsets = [0, 128], sizes = [8, 128], strides = [1, 1]} : vector<8x256xf32> to vector<8x128xf32>
    %109 = arith.mulf %107, %88 : vector<8x128xf32>
    %c0_58 = arith.constant 0 : index
    %c0_59 = arith.constant 0 : index
    %110 = vector.load %arg7[%c0_58, %c0_59] : memref<128x128xf32, #tpu.memory_space<vmem>>, vector<128x128xf32>
    %cst_60 = arith.constant dense<0.000000e+00> : vector<8x128xf32>
    %111 = tpu.matmul %109, %110, %cst_60 {dimension_numbers = #tpu.dot_dimension_numbers<[1], [0], [0], [1], [0, 0, 1, 1], [], []>} : vector<8x128xf32>, vector<128x128xf32>, vector<8x128xf32> -> vector<8x128xf32>
    %112 = vector.extract_strided_slice %97 {offsets = [0, 256], sizes = [8, 128], strides = [1, 1]} : vector<8x384xf32> to vector<8x128xf32>
    %113 = arith.addf %111, %112 : vector<8x128xf32>
    %114 = math.tanh %113 : vector<8x128xf32>
    %115 = arith.subf %114, %88 : vector<8x128xf32>
    %116 = arith.mulf %108, %115 : vector<8x128xf32>
    %117 = arith.addf %88, %116 : vector<8x128xf32>
    %c0_61 = arith.constant 0 : index
    %c3_62 = arith.constant 3 : index
    %c0_63 = arith.constant 0 : index
    %118 = vector.load %arg8[%c0_61, %c3_62, %c0_63] : memref<8x4x128xf32, #tpu.memory_space<vmem>>, vector<8x1x128xf32>
    %119 = vector.shape_cast %118 : vector<8x1x128xf32> to vector<8x128xf32>
    %120 = vector.shape_cast %117 : vector<8x128xf32> to vector<8x1x128xf32>
    tpu.vector_store %arg8[%c0_61, %c3_62, %c0_63], %120 {strides = array<i32>} : memref<8x4x128xf32, #tpu.memory_space<vmem>>, vector<8x1x128xf32>,
    %c0_64 = arith.constant 0 : index
    %c0_65 = arith.constant 0 : index
    %121 = vector.load %arg9[%c0_64, %c0_65] : memref<8x128xf32, #tpu.memory_space<vmem>>, vector<8x128xf32>
    tpu.vector_store %arg9[%c0_64, %c0_65], %117 {strides = array<i32>} : memref<8x128xf32, #tpu.memory_space<vmem>>, vector<8x128xf32>,
    return
  }
  func.func @transform_0(%arg0: i32, %arg1: i32) -> (i32, i32, i32) {
    %c0_i32 = arith.constant 0 : i32
    %c0_i32_0 = arith.constant 0 : i32
    return %arg0, %arg1, %c0_i32 : i32, i32, i32
  }
  func.func @transform_1(%arg0: i32, %arg1: i32) -> (i32, i32) {
    %c0_i32 = arith.constant 0 : i32
    %c0_i32_0 = arith.constant 0 : i32
    return %arg0, %c0_i32 : i32, i32
  }
  func.func @transform_2(%arg0: i32, %arg1: i32) -> (i32, i32) {
    %c0_i32 = arith.constant 0 : i32
    %c0_i32_0 = arith.constant 0 : i32
    %c0_i32_1 = arith.constant 0 : i32
    return %c0_i32, %c0_i32_0 : i32, i32
  }
  func.func @transform_3(%arg0: i32, %arg1: i32) -> (i32, i32) {
    %c0_i32 = arith.constant 0 : i32
    %c0_i32_0 = arith.constant 0 : i32
    %c0_i32_1 = arith.constant 0 : i32
    return %c0_i32, %c0_i32_0 : i32, i32
  }
  func.func @transform_4(%arg0: i32, %arg1: i32) -> (i32, i32) {
    %c0_i32 = arith.constant 0 : i32
    %c0_i32_0 = arith.constant 0 : i32
    %c0_i32_1 = arith.constant 0 : i32
    return %c0_i32, %c0_i32_0 : i32, i32
  }
  func.func @transform_5(%arg0: i32, %arg1: i32) -> (i32, i32) {
    %c0_i32 = arith.constant 0 : i32
    %c0_i32_0 = arith.constant 0 : i32
    %c0_i32_1 = arith.constant 0 : i32
    return %c0_i32, %c0_i32_0 : i32, i32
  }
  func.func @transform_6(%arg0: i32, %arg1: i32) -> (i32, i32, i32) {
    %c0_i32 = arith.constant 0 : i32
    %c0_i32_0 = arith.constant 0 : i32
    return %arg0, %arg1, %c0_i32 : i32, i32, i32
  }
}

</mosaic_0001>

<llo_original>
// kernel: tpu_custom_call.1
$region0: #{tpu_custom_call.1}
  #allocation0 [shape = 'u32[]', space=smem, size = 0x4, offset = 0x4, fixed_abs, tag = 'smem constant byte address 0x4 - core index']
  #allocation1 [shape = 'u32[144,128]{1,0:T(1,128)}', space=vmem, size = 0x12000, scoped, tag = 'internal scratch']
  #allocation2 [shape = 'f32[8,128]{1,0:T(8,128)}', space=vmem, size = 0x1000, scoped, tag = 'scratch operand']
  %s0 = inlined_call_operand.hbm [shape: f32[8,4,16], index: 0, kind: input, shape index: {}]
  %s1 = inlined_call_operand.hbm [shape: f32[8,128], index: 1, kind: input, shape index: {}]
  %s2 = inlined_call_operand.hbm [shape: f32[16,384], index: 2, kind: input, shape index: {}]
  %s3 = inlined_call_operand.vmem [shape: f32[1,384], index: 3, kind: input, shape index: {}]
  %s4 = inlined_call_operand.hbm [shape: f32[128,256], index: 4, kind: input, shape index: {}]
  %s5 = inlined_call_operand.hbm [shape: f32[128,128], index: 5, kind: input, shape index: {}]
  %s6 = inlined_call_operand.hbm [shape: f32[8,4,128], index: 6, kind: output, shape index: {}]
  %s7 = sld [smem:[#allocation0]]
  $region58: #{tpu_custom_call.1} parent=0
    _
  %s9 = ssub.s32 1, %s7
  %s10 = scalar_select 0, %s9, %s7
  $region1: #{tpu_custom_call.1} parent=0
    #allocation3 [shape = 'u8[16384]{0}', space=vmem, size = 0x4000, scoped, tag = 'input window, operand 0, single buffered']
    #allocation4 [shape = 's32[1]{0}', space=sflag, size = 0x4, scoped, tag = 'scoped memory for tpu_custom_call.1']
    #allocation5 [shape = 's32[1]{0}', space=sflag, size = 0x4, scoped, tag = 'scoped memory for tpu_custom_call.1']
    #allocation6 [shape = 'u8[4096]{0}', space=vmem, size = 0x1000, scoped, tag = 'input window, operand 1, single buffered']
    #allocation7 [shape = 's32[1]{0}', space=sflag, size = 0x4, scoped, tag = 'scoped memory for tpu_custom_call.1']
    #allocation8 [shape = 'u8[24576]{0}', space=vmem, size = 0x6000, scoped, tag = 'input window, operand 2, single buffered']
    #allocation9 [shape = 'u8[131072]{0}', space=vmem, size = 0x20000, scoped, tag = 'input window, operand 4, single buffered']
    #allocation10 [shape = 's32[1]{0}', space=sflag, size = 0x4, scoped, tag = 'scoped memory for tpu_custom_call.1']
    #allocation11 [shape = 'u8[65536]{0}', space=vmem, size = 0x10000, scoped, tag = 'input window, operand 5, single buffered']
    #allocation12 [shape = 'u8[16384]{0}', space=vmem, size = 0x4000, scoped, tag = 'output window, operand 0, single buffered']
    %11 = vsyncpa [#allocation4], 0
    %12 = vsyncpa [#allocation7], 0
    %13 = vsyncpa [#allocation10], 0
    %14 = vsyncpa [#allocation5], 0
    // Predicated region
    $region2: #{tpu_custom_call.1} parent=1 // pred_check
      _
    $region3: #{tpu_custom_call.1} parent=1 // pred_check_branch
      %16 = sbr.rel (0) target = $region5
    $region4: #{tpu_custom_call.1} parent=1 // pred_region
      %s18 = ssub.s32 512, 512
      %19 = vsyncadd [#allocation4], %s18
      %s20 = sshll.u32 [#allocation3], 4
      %s21 = int_to_ptr.vmem [resolvable:$true] %s20
      %26 = dma.hbm_to_vmem [thread:$0]  %s0, 512, %s21, [#allocation4], 64, 64, 4
    $region5: #{tpu_custom_call.1} parent=1 // pred_fallthru
      _
    // Predicated region
    $region6: #{tpu_custom_call.1} parent=1 // pred_check
      _
    $region7: #{tpu_custom_call.1} parent=1 // pred_check_branch
      %28 = sbr.rel (0) target = $region9
    $region8: #{tpu_custom_call.1} parent=1 // pred_region
      %s30 = ssub.s32 128, 128
      %31 = vsyncadd [#allocation7], %s30
      %s33 = sshll.u32 [#allocation6], 4
      %s34 = int_to_ptr.vmem [resolvable:$true] %s33
      %36 = dma.hbm_to_vmem [thread:$0]  %s1, 128, %s34, [#allocation7]
    $region9: #{tpu_custom_call.1} parent=1 // pred_fallthru
      _
    // Predicated region
    $region10: #{tpu_custom_call.1} parent=1 // pred_check
      _
    $region11: #{tpu_custom_call.1} parent=1 // pred_check_branch
      %38 = sbr.rel (0) target = $region13
    $region12: #{tpu_custom_call.1} parent=1 // pred_region
      %s40 = ssub.s32 768, 768
      %41 = vsyncadd [#allocation7], %s40
      %s42 = sshll.u32 [#allocation8], 4
      %s43 = int_to_ptr.vmem [resolvable:$true] %s42
      %48 = dma.hbm_to_vmem [thread:$0]  %s2, 768, %s43, [#allocation7], 384, 384, 24
    $region13: #{tpu_custom_call.1} parent=1 // pred_fallthru
      _
    // Predicated region
    $region14: #{tpu_custom_call.1} parent=1 // pred_check
      _
    $region15: #{tpu_custom_call.1} parent=1 // pred_check_branch
      %50 = sbr.rel (0) target = $region17
    $region16: #{tpu_custom_call.1} parent=1 // pred_region
      _
    $region17: #{tpu_custom_call.1} parent=1 // pred_fallthru
      _
    // Predicated region
    $region18: #{tpu_custom_call.1} parent=1 // pred_check
      _
    $region19: #{tpu_custom_call.1} parent=1 // pred_check_branch
      %52 = sbr.rel (0) target = $region21
    $region20: #{tpu_custom_call.1} parent=1 // pred_region
      %s54 = ssub.s32 4096, 4096
      %55 = vsyncadd [#allocation10], %s54
      %s56 = sshll.u32 [#allocation9], 4
      %s57 = int_to_ptr.vmem [resolvable:$true] %s56
      %62 = dma.hbm_to_vmem [thread:$0]  %s4, 4096, %s57, [#allocation10], 256, 256, 16
    $region21: #{tpu_custom_call.1} parent=1 // pred_fallthru
      _
    // Predicated region
    $region22: #{tpu_custom_call.1} parent=1 // pred_check
      _
    $region23: #{tpu_custom_call.1} parent=1 // pred_check_branch
      %64 = sbr.rel (0) target = $region25
    $region24: #{tpu_custom_call.1} parent=1 // pred_region
      %s66 = ssub.s32 2048, 2048
      %67 = vsyncadd [#allocation10], %s66
      %s68 = sshll.u32 [#allocation11], 4
      %s69 = int_to_ptr.vmem [resolvable:$true] %s68
      %74 = dma.hbm_to_vmem [thread:$0]  %s5, 2048, %s69, [#allocation10], 128, 128, 8
    $region25: #{tpu_custom_call.1} parent=1 // pred_fallthru
      _
    // Predicated region
    $region26: #{tpu_custom_call.1} parent=1 // pred_check
      _
    $region27: #{tpu_custom_call.1} parent=1 // pred_check_branch
      %76 = sbr.rel (0) target = $region29
    $region28: #{tpu_custom_call.1} parent=1 // pred_region
      %77 = dma.done [#allocation4], 512
    $region29: #{tpu_custom_call.1} parent=1 // pred_fallthru
      _
    // Predicated region
    $region30: #{tpu_custom_call.1} parent=1 // pred_check
      _
    $region31: #{tpu_custom_call.1} parent=1 // pred_check_branch
      %79 = sbr.rel (0) target = $region33
    $region32: #{tpu_custom_call.1} parent=1 // pred_region
      %80 = dma.done [#allocation7], 128
    $region33: #{tpu_custom_call.1} parent=1 // pred_fallthru
      _
    // Predicated region
    $region34: #{tpu_custom_call.1} parent=1 // pred_check
      _
    $region35: #{tpu_custom_call.1} parent=1 // pred_check_branch
      %82 = sbr.rel (0) target = $region37
    $region36: #{tpu_custom_call.1} parent=1 // pred_region
      %83 = dma.done [#allocation7], 768
    $region37: #{tpu_custom_call.1} parent=1 // pred_fallthru
      _
    // Predicated region
    $region38: #{tpu_custom_call.1} parent=1 // pred_check
      _
    $region39: #{tpu_custom_call.1} parent=1 // pred_check_branch
      %85 = sbr.rel (0) target = $region41
    $region40: #{tpu_custom_call.1} parent=1 // pred_region
      %86 = dma.done [#allocation10], 4096
    $region41: #{tpu_custom_call.1} parent=1 // pred_fallthru
      _
    // Predicated region
    $region42: #{tpu_custom_call.1} parent=1 // pred_check
      _
    $region43: #{tpu_custom_call.1} parent=1 // pred_check_branch
      %88 = sbr.rel (0) target = $region45
    $region44: #{tpu_custom_call.1} parent=1 // pred_region
      %89 = dma.done [#allocation10], 2048
    $region45: #{tpu_custom_call.1} parent=1 // pred_fallthru
      _
    %p90 = scmp.eq.s32.totalorder 0, 0
    // Predicated region
    $region46: #{tpu_custom_call.1} parent=1 // pred_check
      %p91 = pneg %p90
    $region47: #{tpu_custom_call.1} parent=1 // pred_check_branch
      %93 = sbr.rel (%p91) target = $region49
    $region48: #{tpu_custom_call.1} parent=1 // pred_region
      %v94 = vld [vmem:[#allocation6] sm:$0xff]
      %95 = vst [vmem:[#allocation2] sm:$0xff] %v94
    $region49: #{tpu_custom_call.1} parent=1 // pred_fallthru
      _
    %v96 = vld [vmem:[#allocation2] sm:$0xff]
    %v97 = vld [vmem:[%s3] sm:$0x7]
    %v98 = vld [vmem:[#allocation3] sm:$0x1]
    %v99 = vld [vmem:[#allocation3 + $0x4] sm:$0x1]
    %v100 = vld [vmem:[#allocation3 + $0x8] sm:$0x1]
    %v101 = vld [vmem:[#allocation3 + $0xc] sm:$0x1]
    %v102 = vld [vmem:[#allocation3 + $0x10] sm:$0x1]
    %v103 = vld [vmem:[#allocation3 + $0x14] sm:$0x1]
    %v104 = vld [vmem:[#allocation3 + $0x18] sm:$0x1]
    %v105 = vld [vmem:[#allocation3 + $0x1c] sm:$0x1]
    %v106 = vld [vmem:[#allocation8] sm:$0xff]
    %v107 = vld [vmem:[#allocation8 + $0x8] sm:$0xff]
    %v108 = vld [vmem:[#allocation8 + $0x10] sm:$0xff]
    %v109 = vld [vmem:[#allocation8 + $0x18] sm:$0xff]
    %v110 = vld [vmem:[#allocation8 + $0x20] sm:$0xff]
    %v111 = vld [vmem:[#allocation8 + $0x28] sm:$0xff]
    %v113 = vlaneseq
    %v114 = vshrl.u32 %v113, 7
    %v115 = vsub.s32 0, %v114
    %v116 = vrot.slane %v97, %v115
    %v117 = vlaneseq
    %v118 = vshrl.u32 %v117, 7
    %v119 = vsub.s32 1, %v118
    %v120 = vrot.slane %v97, %v119
    %v121 = vlaneseq
    %v122 = vshrl.u32 %v121, 7
    %v123 = vsub.s32 2, %v122
    %v124 = vrot.slane %v97, %v123
    %v136 = vrot.slane %v99, 7
    %vm137 = vcmask 1041409
    %v138 = vsel %vm137, %v136, %v98
    %v139 = vrot.slane %v100, 6
    %vm140 = vcmask 1042434
    %v141 = vsel %vm140, %v139, %v138
    %v142 = vrot.slane %v101, 5
    %vm143 = vcmask 1043459
    %v144 = vsel %vm143, %v142, %v141
    %v145 = vrot.slane %v102, 4
    %vm146 = vcmask 1044484
    %v147 = vsel %vm146, %v145, %v144
    %v148 = vrot.slane %v103, 3
    %vm149 = vcmask 1045509
    %v150 = vsel %vm149, %v148, %v147
    %v151 = vrot.slane %v104, 2
    %vm152 = vcmask 1046534
    %v153 = vsel %vm152, %v151, %v150
    %v154 = vrot.slane %v105, 1
    %vm155 = vcmask 1047559
    %v156 = vsel %vm155, %v154, %v153
    %vm157 = vcmask 130048
    %v158 = vsel %vm157, %v156, 0
    %160 = vmatprep.subr.mxu0 %v107
    %161 = vmatpush1.msra.mxu0 %v106
    %162 = vmatprep.subr.mxu0 %v110
    %163 = vmatpush1.msra.mxu0 %v109
    %164 = vmatprep.subr.mxu0 0.0
    %165 = vmatpush1.msra.mxu0 0.0
    %166 = vmatprep.subr.mxu0 0.0
    %167 = vmatpush1.msra.mxu0 0.0
    %168 = vmatprep.subr.mxu0 0.0
    %169 = vmatpush1.msra.mxu0 0.0
    %170 = vmatprep.subr.mxu0 0.0
    %171 = vmatpush1.msra.mxu0 0.0
    %172 = vmatprep.subr.mxu0 0.0
    %173 = vmatpush1.msra.mxu0 0.0
    %174 = vmatprep.subr.mxu0 0.0
    %175 = vmatpush1.msra.mxu0 0.0
    %176 = vmatprep.subr.mxu0 0.0
    %177 = vmatpush1.msra.mxu0 0.0
    %178 = vmatprep.subr.mxu0 0.0
    %179 = vmatpush1.msra.mxu0 0.0
    %180 = vmatprep.subr.mxu0 0.0
    %181 = vmatpush1.msra.mxu0 0.0
    %182 = vmatprep.subr.mxu0 0.0
    %183 = vmatpush1.msra.mxu0 0.0
    %184 = vmatprep.subr.mxu0 0.0
    %185 = vmatpush1.msra.mxu0 0.0
    %186 = vmatprep.subr.mxu0 0.0
    %187 = vmatpush1.msra.mxu0 0.0
    %188 = vmatprep.subr.mxu0 0.0
    %189 = vmatpush1.msra.mxu0 0.0
    %190 = vmatprep.subr.mxu0 0.0
    %191 = vmatpush1.msra.mxu0 0.0
    %192 = vmatprep.subr.mxu0 0.0
    %193 = vmatpush1.msra.mxu0 0.0
    %194 = vmatprep.subr.mxu0 0.0
    %195 = vmatpush1.msra.mxu0 0.0
    %196 = vmatprep.subr.mxu0 0.0
    %197 = vmatpush1.msra.mxu0 0.0
    %198 = vmatprep.subr.mxu0 0.0
    %199 = vmatpush1.msra.mxu0 0.0
    %200 = vmatprep.subr.mxu0 0.0
    %201 = vmatpush1.msra.mxu0 0.0
    %202 = vmatprep.subr.mxu0 0.0
    %203 = vmatpush1.msra.mxu0 0.0
    %204 = vmatprep.subr.mxu0 0.0
    %205 = vmatpush1.msra.mxu0 0.0
    %206 = vmatprep.subr.mxu0 0.0
    %207 = vmatpush1.msra.mxu0 0.0
    %208 = vmatprep.subr.mxu0 0.0
    %209 = vmatpush1.msra.mxu0 0.0
    %210 = vmatprep.subr.mxu0 0.0
    %211 = vmatpush1.msra.mxu0 0.0
    %212 = vmatprep.subr.mxu0 0.0
    %213 = vmatpush1.msra.mxu0 0.0
    %214 = vmatprep.subr.mxu0 0.0
    %215 = vmatpush1.msra.mxu0 0.0
    %216 = vmatprep.subr.mxu0 0.0
    %217 = vmatpush1.msra.mxu0 0.0
    %218 = vmatprep.subr.mxu0 0.0
    %219 = vmatpush1.msra.mxu0 0.0
    %220 = vmatprep.subr.mxu0 0.0
    %221 = vmatpush1.msra.mxu0 0.0
    %222 = vmatprep.subr.mxu0 0.0
    %223 = vmatpush1.msra.mxu0 0.0
    %224 = vmatprep.mubr.f32.mxu0 0.0
    %225 = vmatmul.mubr.f32.gmra.mrb[0].mxu0 %v158
    %v226 = vpop.f32.mrb[0].mxu0
    %v227 = vadd.f32 %v116, %v226
    %v228 = vpop.f32.mrb[0].mxu0
    %v229 = vadd.f32 %v120, %v228
    %230 = vdwg.mxu0
    %231 = vmatprep.subr.mxu0 0.0
    %232 = vmatpush1.msra.mxu0 %v108
    %233 = vmatprep.subr.mxu0 0.0
    %234 = vmatpush1.msra.mxu0 %v111
    %235 = vmatprep.subr.mxu0 0.0
    %236 = vmatpush1.msra.mxu0 0.0
    %237 = vmatprep.subr.mxu0 0.0
    %238 = vmatpush1.msra.mxu0 0.0
    %239 = vmatprep.subr.mxu0 0.0
    %240 = vmatpush1.msra.mxu0 0.0
    %241 = vmatprep.subr.mxu0 0.0
    %242 = vmatpush1.msra.mxu0 0.0
    %243 = vmatprep.subr.mxu0 0.0
    %244 = vmatpush1.msra.mxu0 0.0
    %245 = vmatprep.subr.mxu0 0.0
    %246 = vmatpush1.msra.mxu0 0.0
    %247 = vmatprep.subr.mxu0 0.0
    %248 = vmatpush1.msra.mxu0 0.0
    %249 = vmatprep.subr.mxu0 0.0
    %250 = vmatpush1.msra.mxu0 0.0
    %251 = vmatprep.subr.mxu0 0.0
    %252 = vmatpush1.msra.mxu0 0.0
    %253 = vmatprep.subr.mxu0 0.0
    %254 = vmatpush1.msra.mxu0 0.0
    %255 = vmatprep.subr.mxu0 0.0
    %256 = vmatpush1.msra.mxu0 0.0
    %257 = vmatprep.subr.mxu0 0.0
    %258 = vmatpush1.msra.mxu0 0.0
    %259 = vmatprep.subr.mxu0 0.0
    %260 = vmatpush1.msra.mxu0 0.0
    %261 = vmatprep.subr.mxu0 0.0
    %262 = vmatpush1.msra.mxu0 0.0
    %263 = vmatprep.subr.mxu0 0.0
    %264 = vmatpush1.msra.mxu0 0.0
    %265 = vmatprep.subr.mxu0 0.0
    %266 = vmatpush1.msra.mxu0 0.0
    %267 = vmatprep.subr.mxu0 0.0
    %268 = vmatpush1.msra.mxu0 0.0
    %269 = vmatprep.subr.mxu0 0.0
    %270 = vmatpush1.msra.mxu0 0.0
    %271 = vmatprep.subr.mxu0 0.0
    %272 = vmatpush1.msra.mxu0 0.0
    %273 = vmatprep.subr.mxu0 0.0
    %274 = vmatpush1.msra.mxu0 0.0
    %275 = vmatprep.subr.mxu0 0.0
    %276 = vmatpush1.msra.mxu0 0.0
    %277 = vmatprep.subr.mxu0 0.0
    %278 = vmatpush1.msra.mxu0 0.0
    %279 = vmatprep.subr.mxu0 0.0
    %280 = vmatpush1.msra.mxu0 0.0
    %281 = vmatprep.subr.mxu0 0.0
    %282 = vmatpush1.msra.mxu0 0.0
    %283 = vmatprep.subr.mxu0 0.0
    %284 = vmatpush1.msra.mxu0 0.0
    %285 = vmatprep.subr.mxu0 0.0
    %286 = vmatpush1.msra.mxu0 0.0
    %287 = vmatprep.subr.mxu0 0.0
    %288 = vmatpush1.msra.mxu0 0.0
    %289 = vmatprep.subr.mxu0 0.0
    %290 = vmatpush1.msra.mxu0 0.0
    %291 = vmatprep.subr.mxu0 0.0
    %292 = vmatpush1.msra.mxu0 0.0
    %293 = vmatprep.subr.mxu0 0.0
    %294 = vmatpush1.msra.mxu0 0.0
    %295 = vmatprep.mubr.f32.mxu0 0.0
    %296 = vmatmul.mubr.f32.gmra.mrb[0].mxu0 %v158
    %v297 = vpop.f32.mrb[0].mxu0
    %v298 = vadd.f32 %v124, %v297
    %v299 = vpop.f32.mrb[0].mxu0
    %300 = vdwg.mxu0
    %v301 = vld [vmem:[#allocation9] sm:$0xff]
    %v302 = vld [vmem:[#allocation9 + $0x8] sm:$0xff]
    %v303 = vld [vmem:[#allocation9 + $0x10] sm:$0xff]
    %v304 = vld [vmem:[#allocation9 + $0x18] sm:$0xff]
    %v305 = vld [vmem:[#allocation9 + $0x20] sm:$0xff]
    %v306 = vld [vmem:[#allocation9 + $0x28] sm:$0xff]
    %v307 = vld [vmem:[#allocation9 + $0x30] sm:$0xff]
    %v308 = vld [vmem:[#allocation9 + $0x38] sm:$0xff]
    %v309 = vld [vmem:[#allocation9 + $0x40] sm:$0xff]
    %v310 = vld [vmem:[#allocation9 + $0x48] sm:$0xff]
    %v311 = vld [vmem:[#allocation9 + $0x50] sm:$0xff]
    %v312 = vld [vmem:[#allocation9 + $0x58] sm:$0xff]
    %v313 = vld [vmem:[#allocation9 + $0x60] sm:$0xff]
    %v314 = vld [vmem:[#allocation9 + $0x68] sm:$0xff]
    %v315 = vld [vmem:[#allocation9 + $0x70] sm:$0xff]
    %v316 = vld [vmem:[#allocation9 + $0x78] sm:$0xff]
    %v317 = vld [vmem:[#allocation9 + $0x80] sm:$0xff]
    %v318 = vld [vmem:[#allocation9 + $0x88] sm:$0xff]
    %v319 = vld [vmem:[#allocation9 + $0x90] sm:$0xff]
    %v320 = vld [vmem:[#allocation9 + $0x98] sm:$0xff]
    %v321 = vld [vmem:[#allocation9 + $0xa0] sm:$0xff]
    %v322 = vld [vmem:[#allocation9 + $0xa8] sm:$0xff]
    %v323 = vld [vmem:[#allocation9 + $0xb0] sm:$0xff]
    %v324 = vld [vmem:[#allocation9 + $0xb8] sm:$0xff]
    %v325 = vld [vmem:[#allocation9 + $0xc0] sm:$0xff]
    %v326 = vld [vmem:[#allocation9 + $0xc8] sm:$0xff]
    %v327 = vld [vmem:[#allocation9 + $0xd0] sm:$0xff]
    %v328 = vld [vmem:[#allocation9 + $0xd8] sm:$0xff]
    %v329 = vld [vmem:[#allocation9 + $0xe0] sm:$0xff]
    %v330 = vld [vmem:[#allocation9 + $0xe8] sm:$0xff]
    %v331 = vld [vmem:[#allocation9 + $0xf0] sm:$0xff]
    %v332 = vld [vmem:[#allocation9 + $0xf8] sm:$0xff]
    %333 = vmatprep.subr.mxu0 %v302
    %334 = vmatpush1.msra.mxu0 %v301
    %335 = vmatprep.subr.mxu0 %v304
    %336 = vmatpush1.msra.mxu0 %v303
    %337 = vmatprep.subr.mxu0 %v306
    %338 = vmatpush1.msra.mxu0 %v305
    %339 = vmatprep.subr.mxu0 %v308
    %340 = vmatpush1.msra.mxu0 %v307
    %341 = vmatprep.subr.mxu0 %v310
    %342 = vmatpush1.msra.mxu0 %v309
    %343 = vmatprep.subr.mxu0 %v312
    %344 = vmatpush1.msra.mxu0 %v311
    %345 = vmatprep.subr.mxu0 %v314
    %346 = vmatpush1.msra.mxu0 %v313
    %347 = vmatprep.subr.mxu0 %v316
    %348 = vmatpush1.msra.mxu0 %v315
    %349 = vmatprep.subr.mxu0 %v318
    %350 = vmatpush1.msra.mxu0 %v317
    %351 = vmatprep.subr.mxu0 %v320
    %352 = vmatpush1.msra.mxu0 %v319
    %353 = vmatprep.subr.mxu0 %v322
    %354 = vmatpush1.msra.mxu0 %v321
    %355 = vmatprep.subr.mxu0 %v324
    %356 = vmatpush1.msra.mxu0 %v323
    %357 = vmatprep.subr.mxu0 %v326
    %358 = vmatpush1.msra.mxu0 %v325
    %359 = vmatprep.subr.mxu0 %v328
    %360 = vmatpush1.msra.mxu0 %v327
    %361 = vmatprep.subr.mxu0 %v330
    %362 = vmatpush1.msra.mxu0 %v329
    %363 = vmatprep.subr.mxu0 %v332
    %364 = vmatpush1.msra.mxu0 %v331
    %365 = vmatprep.subr.mxu0 0.0
    %366 = vmatpush1.msra.mxu0 0.0
    %367 = vmatprep.subr.mxu0 0.0
    %368 = vmatpush1.msra.mxu0 0.0
    %369 = vmatprep.subr.mxu0 0.0
    %370 = vmatpush1.msra.mxu0 0.0
    %371 = vmatprep.subr.mxu0 0.0
    %372 = vmatpush1.msra.mxu0 0.0
    %373 = vmatprep.subr.mxu0 0.0
    %374 = vmatpush1.msra.mxu0 0.0
    %375 = vmatprep.subr.mxu0 0.0
    %376 = vmatpush1.msra.mxu0 0.0
    %377 = vmatprep.subr.mxu0 0.0
    %378 = vmatpush1.msra.mxu0 0.0
    %379 = vmatprep.subr.mxu0 0.0
    %380 = vmatpush1.msra.mxu0 0.0
    %381 = vmatprep.subr.mxu0 0.0
    %382 = vmatpush1.msra.mxu0 0.0
    %383 = vmatprep.subr.mxu0 0.0
    %384 = vmatpush1.msra.mxu0 0.0
    %385 = vmatprep.subr.mxu0 0.0
    %386 = vmatpush1.msra.mxu0 0.0
    %387 = vmatprep.subr.mxu0 0.0
    %388 = vmatpush1.msra.mxu0 0.0
    %389 = vmatprep.subr.mxu0 0.0
    %390 = vmatpush1.msra.mxu0 0.0
    %391 = vmatprep.subr.mxu0 0.0
    %392 = vmatpush1.msra.mxu0 0.0
    %393 = vmatprep.subr.mxu0 0.0
    %394 = vmatpush1.msra.mxu0 0.0
    %395 = vmatprep.subr.mxu0 0.0
    %396 = vmatpush1.msra.mxu0 0.0
    %397 = vmatprep.mubr.f32.mxu0 0.0
    %398 = vmatmul.mubr.f32.gmra.mrb[0].mxu0 %v96
    %v399 = vpop.f32.mrb[0].mxu0
    %v400 = vadd.f32 %v227, %v399
    %v401 = vpop.f32.mrb[0].mxu0
    %v402 = vadd.f32 %v229, %v401
    %403 = vdwg.mxu0
    %v404 = vxor.u32 %v400, 2147483648
    %v405 = vxor.u32 %v402, 2147483648
    %v406 = vmul.f32 %v404, 1.442695
    %v407 = vpow.pop %v406
    %v408 = vmul.f32 %v405, 1.442695
    %v409 = vpow.pop %v408
    %v410 = vadd.f32 %v407, 1.0
    %v411 = vadd.f32 %v409, 1.0
    %v412 = vrcp.pop %v410
    %v413 = vmul.f32 1.0, %v412
    %v414 = vrcp.pop %v411
    %v415 = vmul.f32 1.0, %v414
    %v416 = vmul.f32 %v413, %v96
    %v417 = vld [vmem:[#allocation11] sm:$0xff]
    %v418 = vld [vmem:[#allocation11 + $0x8] sm:$0xff]
    %v419 = vld [vmem:[#allocation11 + $0x10] sm:$0xff]
    %v420 = vld [vmem:[#allocation11 + $0x18] sm:$0xff]
    %v421 = vld [vmem:[#allocation11 + $0x20] sm:$0xff]
    %v422 = vld [vmem:[#allocation11 + $0x28] sm:$0xff]
    %v423 = vld [vmem:[#allocation11 + $0x30] sm:$0xff]
    %v424 = vld [vmem:[#allocation11 + $0x38] sm:$0xff]
    %v425 = vld [vmem:[#allocation11 + $0x40] sm:$0xff]
    %v426 = vld [vmem:[#allocation11 + $0x48] sm:$0xff]
    %v427 = vld [vmem:[#allocation11 + $0x50] sm:$0xff]
    %v428 = vld [vmem:[#allocation11 + $0x58] sm:$0xff]
    %v429 = vld [vmem:[#allocation11 + $0x60] sm:$0xff]
    %v430 = vld [vmem:[#allocation11 + $0x68] sm:$0xff]
    %v431 = vld [vmem:[#allocation11 + $0x70] sm:$0xff]
    %v432 = vld [vmem:[#allocation11 + $0x78] sm:$0xff]
    %433 = vmatprep.subr.mxu0 0.0
    %434 = vmatpush1.msra.mxu0 %v417
    %435 = vmatprep.subr.mxu0 0.0
    %436 = vmatpush1.msra.mxu0 %v418
    %437 = vmatprep.subr.mxu0 0.0
    %438 = vmatpush1.msra.mxu0 %v419
    %439 = vmatprep.subr.mxu0 0.0
    %440 = vmatpush1.msra.mxu0 %v420
    %441 = vmatprep.subr.mxu0 0.0
    %442 = vmatpush1.msra.mxu0 %v421
    %443 = vmatprep.subr.mxu0 0.0
    %444 = vmatpush1.msra.mxu0 %v422
    %445 = vmatprep.subr.mxu0 0.0
    %446 = vmatpush1.msra.mxu0 %v423
    %447 = vmatprep.subr.mxu0 0.0
    %448 = vmatpush1.msra.mxu0 %v424
    %449 = vmatprep.subr.mxu0 0.0
    %450 = vmatpush1.msra.mxu0 %v425
    %451 = vmatprep.subr.mxu0 0.0
    %452 = vmatpush1.msra.mxu0 %v426
    %453 = vmatprep.subr.mxu0 0.0
    %454 = vmatpush1.msra.mxu0 %v427
    %455 = vmatprep.subr.mxu0 0.0
    %456 = vmatpush1.msra.mxu0 %v428
    %457 = vmatprep.subr.mxu0 0.0
    %458 = vmatpush1.msra.mxu0 %v429
    %459 = vmatprep.subr.mxu0 0.0
    %460 = vmatpush1.msra.mxu0 %v430
    %461 = vmatprep.subr.mxu0 0.0
    %462 = vmatpush1.msra.mxu0 %v431
    %463 = vmatprep.subr.mxu0 0.0
    %464 = vmatpush1.msra.mxu0 %v432
    %465 = vmatprep.subr.mxu0 0.0
    %466 = vmatpush1.msra.mxu0 0.0
    %467 = vmatprep.subr.mxu0 0.0
    %468 = vmatpush1.msra.mxu0 0.0
    %469 = vmatprep.subr.mxu0 0.0
    %470 = vmatpush1.msra.mxu0 0.0
    %471 = vmatprep.subr.mxu0 0.0
    %472 = vmatpush1.msra.mxu0 0.0
    %473 = vmatprep.subr.mxu0 0.0
    %474 = vmatpush1.msra.mxu0 0.0
    %475 = vmatprep.subr.mxu0 0.0
    %476 = vmatpush1.msra.mxu0 0.0
    %477 = vmatprep.subr.mxu0 0.0
    %478 = vmatpush1.msra.mxu0 0.0
    %479 = vmatprep.subr.mxu0 0.0
    %480 = vmatpush1.msra.mxu0 0.0
    %481 = vmatprep.subr.mxu0 0.0
    %482 = vmatpush1.msra.mxu0 0.0
    %483 = vmatprep.subr.mxu0 0.0
    %484 = vmatpush1.msra.mxu0 0.0
    %485 = vmatprep.subr.mxu0 0.0
    %486 = vmatpush1.msra.mxu0 0.0
    %487 = vmatprep.subr.mxu0 0.0
    %488 = vmatpush1.msra.mxu0 0.0
    %489 = vmatprep.subr.mxu0 0.0
    %490 = vmatpush1.msra.mxu0 0.0
    %491 = vmatprep.subr.mxu0 0.0
    %492 = vmatpush1.msra.mxu0 0.0
    %493 = vmatprep.subr.mxu0 0.0
    %494 = vmatpush1.msra.mxu0 0.0
    %495 = vmatprep.subr.mxu0 0.0
    %496 = vmatpush1.msra.mxu0 0.0
    %497 = vmatprep.mubr.f32.mxu0 0.0
    %498 = vmatmul.mubr.f32.gmra.mrb[0].mxu0 %v416
    %v499 = vpop.f32.mrb[0].mxu0
    %v500 = vadd.f32 %v298, %v499
    %v501 = vpop.f32.mrb[0].mxu0
    %502 = vdwg.mxu0
    %v503 = vtanh.pop %v500
    %v504 = vsub.f32 %v503, %v96
    %v505 = vmul.f32 %v415, %v504
    %v506 = vadd.f32 %v96, %v505
    %v508 = vcombine.high %v506, %v506
    %v510 = vunpack.c.l.s4 1966171168
    %v511 = vunpack.c.0.s8 %v510
    %v512 = vlaneseq
    %v513 = vshrl.u32 %v512, 7
    %v514 = vsub.s32 %v511, %v513
    %v515 = vrot.slane %v506, %v514
    %v517 = vunpack.c.l.s4 1966171168
    %v518 = vunpack.c.0.s8 %v517
    %v519 = vlaneseq
    %v520 = vshrl.u32 %v519, 7
    %v521 = vsub.s32 %v518, %v520
    %v522 = vrot.slane %v508, %v521
    %v523 = vcombine.high %v515, %v515
    %v524 = vcombine.high %v522, %v522
    %v526 = vunpack.c.l.s4 1966171168
    %v527 = vunpack.c.0.s8 %v526
    %v528 = vlaneseq
    %v529 = vshrl.u32 %v528, 7
    %v530 = vsub.s32 %v527, %v529
    %v531 = vrot.slane %v515, %v530
    %v533 = vunpack.c.l.s4 1966171168
    %v534 = vunpack.c.0.s8 %v533
    %v535 = vlaneseq
    %v536 = vshrl.u32 %v535, 7
    %v537 = vsub.s32 %v534, %v536
    %v538 = vrot.slane %v522, %v537
    %v540 = vunpack.c.l.s4 1966171168
    %v541 = vunpack.c.0.s8 %v540
    %v542 = vlaneseq
    %v543 = vshrl.u32 %v542, 7
    %v544 = vsub.s32 %v541, %v543
    %v545 = vrot.slane %v523, %v544
    %v547 = vunpack.c.l.s4 1966171168
    %v548 = vunpack.c.0.s8 %v547
    %v549 = vlaneseq
    %v550 = vshrl.u32 %v549, 7
    %v551 = vsub.s32 %v548, %v550
    %v552 = vrot.slane %v524, %v551
    %v553 = vcombine.high %v531, %v531
    %v554 = vcombine.high %v538, %v538
    %v555 = vcombine.high %v545, %v545
    %v556 = vcombine.high %v552, %v552
    %565 = vst [vmem:[#allocation12] sm:$0x1] %v531
    %566 = vst [vmem:[#allocation12 + $0x4] sm:$0x1] %v545
    %567 = vst [vmem:[#allocation12 + $0x8] sm:$0x1] %v553
    %568 = vst [vmem:[#allocation12 + $0xc] sm:$0x1] %v555
    %569 = vst [vmem:[#allocation12 + $0x10] sm:$0x1] %v538
    %570 = vst [vmem:[#allocation12 + $0x14] sm:$0x1] %v552
    %571 = vst [vmem:[#allocation12 + $0x18] sm:$0x1] %v554
    %572 = vst [vmem:[#allocation12 + $0x1c] sm:$0x1] %v556
    %v573 = vld [vmem:[#allocation3 + $0x1] sm:$0x1]
    %v574 = vld [vmem:[#allocation3 + $0x5] sm:$0x1]
    %v575 = vld [vmem:[#allocation3 + $0x9] sm:$0x1]
    %v576 = vld [vmem:[#allocation3 + $0xd] sm:$0x1]
    %v577 = vld [vmem:[#allocation3 + $0x11] sm:$0x1]
    %v578 = vld [vmem:[#allocation3 + $0x15] sm:$0x1]
    %v579 = vld [vmem:[#allocation3 + $0x19] sm:$0x1]
    %v580 = vld [vmem:[#allocation3 + $0x1d] sm:$0x1]
    %v581 = vld [vmem:[#allocation8] sm:$0xff]
    %v582 = vld [vmem:[#allocation8 + $0x8] sm:$0xff]
    %v583 = vld [vmem:[#allocation8 + $0x10] sm:$0xff]
    %v584 = vld [vmem:[#allocation8 + $0x18] sm:$0xff]
    %v585 = vld [vmem:[#allocation8 + $0x20] sm:$0xff]
    %v586 = vld [vmem:[#allocation8 + $0x28] sm:$0xff]
    %v595 = vrot.slane %v574, 7
    %v596 = vsel %vm137, %v595, %v573
    %v597 = vrot.slane %v575, 6
    %v598 = vsel %vm140, %v597, %v596
    %v599 = vrot.slane %v576, 5
    %v600 = vsel %vm143, %v599, %v598
    %v601 = vrot.slane %v577, 4
    %v602 = vsel %vm146, %v601, %v600
    %v603 = vrot.slane %v578, 3
    %v604 = vsel %vm149, %v603, %v602
    %v605 = vrot.slane %v579, 2
    %v606 = vsel %vm152, %v605, %v604
    %v607 = vrot.slane %v580, 1
    %v608 = vsel %vm155, %v607, %v606
    %v609 = vsel %vm157, %v608, 0
    %611 = vmatprep.subr.mxu0 %v582
    %612 = vmatpush1.msra.mxu0 %v581
    %613 = vmatprep.subr.mxu0 %v585
    %614 = vmatpush1.msra.mxu0 %v584
    %615 = vmatprep.subr.mxu0 0.0
    %616 = vmatpush1.msra.mxu0 0.0
    %617 = vmatprep.subr.mxu0 0.0
    %618 = vmatpush1.msra.mxu0 0.0
    %619 = vmatprep.subr.mxu0 0.0
    %620 = vmatpush1.msra.mxu0 0.0
    %621 = vmatprep.subr.mxu0 0.0
    %622 = vmatpush1.msra.mxu0 0.0
    %623 = vmatprep.subr.mxu0 0.0
    %624 = vmatpush1.msra.mxu0 0.0
    %625 = vmatprep.subr.mxu0 0.0
    %626 = vmatpush1.msra.mxu0 0.0
    %627 = vmatprep.subr.mxu0 0.0
    %628 = vmatpush1.msra.mxu0 0.0
    %629 = vmatprep.subr.mxu0 0.0
    %630 = vmatpush1.msra.mxu0 0.0
    %631 = vmatprep.subr.mxu0 0.0
    %632 = vmatpush1.msra.mxu0 0.0
    %633 = vmatprep.subr.mxu0 0.0
    %634 = vmatpush1.msra.mxu0 0.0
    %635 = vmatprep.subr.mxu0 0.0
    %636 = vmatpush1.msra.mxu0 0.0
    %637 = vmatprep.subr.mxu0 0.0
    %638 = vmatpush1.msra.mxu0 0.0
    %639 = vmatprep.subr.mxu0 0.0
    %640 = vmatpush1.msra.mxu0 0.0
    %641 = vmatprep.subr.mxu0 0.0
    %642 = vmatpush1.msra.mxu0 0.0
    %643 = vmatprep.subr.mxu0 0.0
    %644 = vmatpush1.msra.mxu0 0.0
    %645 = vmatprep.subr.mxu0 0.0
    %646 = vmatpush1.msra.mxu0 0.0
    %647 = vmatprep.subr.mxu0 0.0
    %648 = vmatpush1.msra.mxu0 0.0
    %649 = vmatprep.subr.mxu0 0.0
    %650 = vmatpush1.msra.mxu0 0.0
    %651 = vmatprep.subr.mxu0 0.0
    %652 = vmatpush1.msra.mxu0 0.0
    %653 = vmatprep.subr.mxu0 0.0
    %654 = vmatpush1.msra.mxu0 0.0
    %655 = vmatprep.subr.mxu0 0.0
    %656 = vmatpush1.msra.mxu0 0.0
    %657 = vmatprep.subr.mxu0 0.0
    %658 = vmatpush1.msra.mxu0 0.0
    %659 = vmatprep.subr.mxu0 0.0
    %660 = vmatpush1.msra.mxu0 0.0
    %661 = vmatprep.subr.mxu0 0.0
    %662 = vmatpush1.msra.mxu0 0.0
    %663 = vmatprep.subr.mxu0 0.0
    %664 = vmatpush1.msra.mxu0 0.0
    %665 = vmatprep.subr.mxu0 0.0
    %666 = vmatpush1.msra.mxu0 0.0
    %667 = vmatprep.subr.mxu0 0.0
    %668 = vmatpush1.msra.mxu0 0.0
    %669 = vmatprep.subr.mxu0 0.0
    %670 = vmatpush1.msra.mxu0 0.0
    %671 = vmatprep.subr.mxu0 0.0
    %672 = vmatpush1.msra.mxu0 0.0
    %673 = vmatprep.subr.mxu0 0.0
    %674 = vmatpush1.msra.mxu0 0.0
    %675 = vmatprep.mubr.f32.mxu0 0.0
    %676 = vmatmul.mubr.f32.gmra.mrb[0].mxu0 %v609
    %v677 = vpop.f32.mrb[0].mxu0
    %v678 = vadd.f32 %v116, %v677
    %v679 = vpop.f32.mrb[0].mxu0
    %v680 = vadd.f32 %v120, %v679
    %681 = vdwg.mxu0
    %682 = vmatprep.subr.mxu0 0.0
    %683 = vmatpush1.msra.mxu0 %v583
    %684 = vmatprep.subr.mxu0 0.0
    %685 = vmatpush1.msra.mxu0 %v586
    %686 = vmatprep.subr.mxu0 0.0
    %687 = vmatpush1.msra.mxu0 0.0
    %688 = vmatprep.subr.mxu0 0.0
    %689 = vmatpush1.msra.mxu0 0.0
    %690 = vmatprep.subr.mxu0 0.0
    %691 = vmatpush1.msra.mxu0 0.0
    %692 = vmatprep.subr.mxu0 0.0
    %693 = vmatpush1.msra.mxu0 0.0
    %694 = vmatprep.subr.mxu0 0.0
    %695 = vmatpush1.msra.mxu0 0.0
    %696 = vmatprep.subr.mxu0 0.0
    %697 = vmatpush1.msra.mxu0 0.0
    %698 = vmatprep.subr.mxu0 0.0
    %699 = vmatpush1.msra.mxu0 0.0
    %700 = vmatprep.subr.mxu0 0.0
    %701 = vmatpush1.msra.mxu0 0.0
    %702 = vmatprep.subr.mxu0 0.0
    %703 = vmatpush1.msra.mxu0 0.0
    %704 = vmatprep.subr.mxu0 0.0
    %705 = vmatpush1.msra.mxu0 0.0
    %706 = vmatprep.subr.mxu0 0.0
    %707 = vmatpush1.msra.mxu0 0.0
    %708 = vmatprep.subr.mxu0 0.0
    %709 = vmatpush1.msra.mxu0 0.0
    %710 = vmatprep.subr.mxu0 0.0
    %711 = vmatpush1.msra.mxu0 0.0
    %712 = vmatprep.subr.mxu0 0.0
    %713 = vmatpush1.msra.mxu0 0.0
    %714 = vmatprep.subr.mxu0 0.0
    %715 = vmatpush1.msra.mxu0 0.0
    %716 = vmatprep.subr.mxu0 0.0
    %717 = vmatpush1.msra.mxu0 0.0
    %718 = vmatprep.subr.mxu0 0.0
    %719 = vmatpush1.msra.mxu0 0.0
    %720 = vmatprep.subr.mxu0 0.0
    %721 = vmatpush1.msra.mxu0 0.0
    %722 = vmatprep.subr.mxu0 0.0
    %723 = vmatpush1.msra.mxu0 0.0
    %724 = vmatprep.subr.mxu0 0.0
    %725 = vmatpush1.msra.mxu0 0.0
    %726 = vmatprep.subr.mxu0 0.0
    %727 = vmatpush1.msra.mxu0 0.0
    %728 = vmatprep.subr.mxu0 0.0
    %729 = vmatpush1.msra.mxu0 0.0
    %730 = vmatprep.subr.mxu0 0.0
    %731 = vmatpush1.msra.mxu0 0.0
    %732 = vmatprep.subr.mxu0 0.0
    %733 = vmatpush1.msra.mxu0 0.0
    %734 = vmatprep.subr.mxu0 0.0
    %735 = vmatpush1.msra.mxu0 0.0
    %736 = vmatprep.subr.mxu0 0.0
    %737 = vmatpush1.msra.mxu0 0.0
    %738 = vmatprep.subr.mxu0 0.0
    %739 = vmatpush1.msra.mxu0 0.0
    %740 = vmatprep.subr.mxu0 0.0
    %741 = vmatpush1.msra.mxu0 0.0
    %742 = vmatprep.subr.mxu0 0.0
    %743 = vmatpush1.msra.mxu0 0.0
    %744 = vmatprep.subr.mxu0 0.0
    %745 = vmatpush1.msra.mxu0 0.0
    %746 = vmatprep.mubr.f32.mxu0 0.0
    %747 = vmatmul.mubr.f32.gmra.mrb[0].mxu0 %v609
    %v748 = vpop.f32.mrb[0].mxu0
    %v749 = vadd.f32 %v124, %v748
    %v750 = vpop.f32.mrb[0].mxu0
    %751 = vdwg.mxu0
    %v752 = vld [vmem:[#allocation9] sm:$0xff]
    %v753 = vld [vmem:[#allocation9 + $0x8] sm:$0xff]
    %v754 = vld [vmem:[#allocation9 + $0x10] sm:$0xff]
    %v755 = vld [vmem:[#allocation9 + $0x18] sm:$0xff]
    %v756 = vld [vmem:[#allocation9 + $0x20] sm:$0xff]
    %v757 = vld [vmem:[#allocation9 + $0x28] sm:$0xff]
    %v758 = vld [vmem:[#allocation9 + $0x30] sm:$0xff]
    %v759 = vld [vmem:[#allocation9 + $0x38] sm:$0xff]
    %v760 = vld [vmem:[#allocation9 + $0x40] sm:$0xff]
    %v761 = vld [vmem:[#allocation9 + $0x48] sm:$0xff]
    %v762 = vld [vmem:[#allocation9 + $0x50] sm:$0xff]
    %v763 = vld [vmem:[#allocation9 + $0x58] sm:$0xff]
    %v764 = vld [vmem:[#allocation9 + $0x60] sm:$0xff]
    %v765 = vld [vmem:[#allocation9 + $0x68] sm:$0xff]
    %v766 = vld [vmem:[#allocation9 + $0x70] sm:$0xff]
    %v767 = vld [vmem:[#allocation9 + $0x78] sm:$0xff]
    %v768 = vld [vmem:[#allocation9 + $0x80] sm:$0xff]
    %v769 = vld [vmem:[#allocation9 + $0x88] sm:$0xff]
    %v770 = vld [vmem:[#allocation9 + $0x90] sm:$0xff]
    %v771 = vld [vmem:[#allocation9 + $0x98] sm:$0xff]
    %v772 = vld [vmem:[#allocation9 + $0xa0] sm:$0xff]
    %v773 = vld [vmem:[#allocation9 + $0xa8] sm:$0xff]
    %v774 = vld [vmem:[#allocation9 + $0xb0] sm:$0xff]
    %v775 = vld [vmem:[#allocation9 + $0xb8] sm:$0xff]
    %v776 = vld [vmem:[#allocation9 + $0xc0] sm:$0xff]
    %v777 = vld [vmem:[#allocation9 + $0xc8] sm:$0xff]
    %v778 = vld [vmem:[#allocation9 + $0xd0] sm:$0xff]
    %v779 = vld [vmem:[#allocation9 + $0xd8] sm:$0xff]
    %v780 = vld [vmem:[#allocation9 + $0xe0] sm:$0xff]
    %v781 = vld [vmem:[#allocation9 + $0xe8] sm:$0xff]
    %v782 = vld [vmem:[#allocation9 + $0xf0] sm:$0xff]
    %v783 = vld [vmem:[#allocation9 + $0xf8] sm:$0xff]
    %784 = vmatprep.subr.mxu0 %v753
    %785 = vmatpush1.msra.mxu0 %v752
    %786 = vmatprep.subr.mxu0 %v755
    %787 = vmatpush1.msra.mxu0 %v754
    %788 = vmatprep.subr.mxu0 %v757
    %789 = vmatpush1.msra.mxu0 %v756
    %790 = vmatprep.subr.mxu0 %v759
    %791 = vmatpush1.msra.mxu0 %v758
    %792 = vmatprep.subr.mxu0 %v761
    %793 = vmatpush1.msra.mxu0 %v760
    %794 = vmatprep.subr.mxu0 %v763
    %795 = vmatpush1.msra.mxu0 %v762
    %796 = vmatprep.subr.mxu0 %v765
    %797 = vmatpush1.msra.mxu0 %v764
    %798 = vmatprep.subr.mxu0 %v767
    %799 = vmatpush1.msra.mxu0 %v766
    %800 = vmatprep.subr.mxu0 %v769
    %801 = vmatpush1.msra.mxu0 %v768
    %802 = vmatprep.subr.mxu0 %v771
    %803 = vmatpush1.msra.mxu0 %v770
    %804 = vmatprep.subr.mxu0 %v773
    %805 = vmatpush1.msra.mxu0 %v772
    %806 = vmatprep.subr.mxu0 %v775
    %807 = vmatpush1.msra.mxu0 %v774
    %808 = vmatprep.subr.mxu0 %v777
    %809 = vmatpush1.msra.mxu0 %v776
    %810 = vmatprep.subr.mxu0 %v779
    %811 = vmatpush1.msra.mxu0 %v778
    %812 = vmatprep.subr.mxu0 %v781
    %813 = vmatpush1.msra.mxu0 %v780
    %814 = vmatprep.subr.mxu0 %v783
    %815 = vmatpush1.msra.mxu0 %v782
    %816 = vmatprep.subr.mxu0 0.0
    %817 = vmatpush1.msra.mxu0 0.0
    %818 = vmatprep.subr.mxu0 0.0
    %819 = vmatpush1.msra.mxu0 0.0
    %820 = vmatprep.subr.mxu0 0.0
    %821 = vmatpush1.msra.mxu0 0.0
    %822 = vmatprep.subr.mxu0 0.0
    %823 = vmatpush1.msra.mxu0 0.0
    %824 = vmatprep.subr.mxu0 0.0
    %825 = vmatpush1.msra.mxu0 0.0
    %826 = vmatprep.subr.mxu0 0.0
    %827 = vmatpush1.msra.mxu0 0.0
    %828 = vmatprep.subr.mxu0 0.0
    %829 = vmatpush1.msra.mxu0 0.0
    %830 = vmatprep.subr.mxu0 0.0
    %831 = vmatpush1.msra.mxu0 0.0
    %832 = vmatprep.subr.mxu0 0.0
    %833 = vmatpush1.msra.mxu0 0.0
    %834 = vmatprep.subr.mxu0 0.0
    %835 = vmatpush1.msra.mxu0 0.0
    %836 = vmatprep.subr.mxu0 0.0
    %837 = vmatpush1.msra.mxu0 0.0
    %838 = vmatprep.subr.mxu0 0.0
    %839 = vmatpush1.msra.mxu0 0.0
    %840 = vmatprep.subr.mxu0 0.0
    %841 = vmatpush1.msra.mxu0 0.0
    %842 = vmatprep.subr.mxu0 0.0
    %843 = vmatpush1.msra.mxu0 0.0
    %844 = vmatprep.subr.mxu0 0.0
    %845 = vmatpush1.msra.mxu0 0.0
    %846 = vmatprep.subr.mxu0 0.0
    %847 = vmatpush1.msra.mxu0 0.0
    %848 = vmatprep.mubr.f32.mxu0 0.0
    %849 = vmatmul.mubr.f32.gmra.mrb[0].mxu0 %v506
    %v850 = vpop.f32.mrb[0].mxu0
    %v851 = vadd.f32 %v678, %v850
    %v852 = vpop.f32.mrb[0].mxu0
    %v853 = vadd.f32 %v680, %v852
    %854 = vdwg.mxu0
    %v855 = vxor.u32 %v851, 2147483648
    %v856 = vxor.u32 %v853, 2147483648
    %v857 = vmul.f32 %v855, 1.442695
    %v858 = vpow.pop %v857
    %v859 = vmul.f32 %v856, 1.442695
    %v860 = vpow.pop %v859
    %v861 = vadd.f32 %v858, 1.0
    %v862 = vadd.f32 %v860, 1.0
    %v863 = vrcp.pop %v861
    %v864 = vmul.f32 1.0, %v863
    %v865 = vrcp.pop %v862
    %v866 = vmul.f32 1.0, %v865
    %v867 = vmul.f32 %v864, %v506
    %v868 = vld [vmem:[#allocation11] sm:$0xff]
    %v869 = vld [vmem:[#allocation11 + $0x8] sm:$0xff]
    %v870 = vld [vmem:[#allocation11 + $0x10] sm:$0xff]
    %v871 = vld [vmem:[#allocation11 + $0x18] sm:$0xff]
    %v872 = vld [vmem:[#allocation11 + $0x20] sm:$0xff]
    %v873 = vld [vmem:[#allocation11 + $0x28] sm:$0xff]
    %v874 = vld [vmem:[#allocation11 + $0x30] sm:$0xff]
    %v875 = vld [vmem:[#allocation11 + $0x38] sm:$0xff]
    %v876 = vld [vmem:[#allocation11 + $0x40] sm:$0xff]
    %v877 = vld [vmem:[#allocation11 + $0x48] sm:$0xff]
    %v878 = vld [vmem:[#allocation11 + $0x50] sm:$0xff]
    %v879 = vld [vmem:[#allocation11 + $0x58] sm:$0xff]
    %v880 = vld [vmem:[#allocation11 + $0x60] sm:$0xff]
    %v881 = vld [vmem:[#allocation11 + $0x68] sm:$0xff]
    %v882 = vld [vmem:[#allocation11 + $0x70] sm:$0xff]
    %v883 = vld [vmem:[#allocation11 + $0x78] sm:$0xff]
    %884 = vmatprep.subr.mxu0 0.0
    %885 = vmatpush1.msra.mxu0 %v868
    %886 = vmatprep.subr.mxu0 0.0
    %887 = vmatpush1.msra.mxu0 %v869
    %888 = vmatprep.subr.mxu0 0.0
    %889 = vmatpush1.msra.mxu0 %v870
    %890 = vmatprep.subr.mxu0 0.0
    %891 = vmatpush1.msra.mxu0 %v871
    %892 = vmatprep.subr.mxu0 0.0
    %893 = vmatpush1.msra.mxu0 %v872
    %894 = vmatprep.subr.mxu0 0.0
    %895 = vmatpush1.msra.mxu0 %v873
    %896 = vmatprep.subr.mxu0 0.0
    %897 = vmatpush1.msra.mxu0 %v874
    %898 = vmatprep.subr.mxu0 0.0
    %899 = vmatpush1.msra.mxu0 %v875
    %900 = vmatprep.subr.mxu0 0.0
    %901 = vmatpush1.msra.mxu0 %v876
    %902 = vmatprep.subr.mxu0 0.0
    %903 = vmatpush1.msra.mxu0 %v877
    %904 = vmatprep.subr.mxu0 0.0
    %905 = vmatpush1.msra.mxu0 %v878
    %906 = vmatprep.subr.mxu0 0.0
    %907 = vmatpush1.msra.mxu0 %v879
    %908 = vmatprep.subr.mxu0 0.0
    %909 = vmatpush1.msra.mxu0 %v880
    %910 = vmatprep.subr.mxu0 0.0
    %911 = vmatpush1.msra.mxu0 %v881
    %912 = vmatprep.subr.mxu0 0.0
    %913 = vmatpush1.msra.mxu0 %v882
    %914 = vmatprep.subr.mxu0 0.0
    %915 = vmatpush1.msra.mxu0 %v883
    %916 = vmatprep.subr.mxu0 0.0
    %917 = vmatpush1.msra.mxu0 0.0
    %918 = vmatprep.subr.mxu0 0.0
    %919 = vmatpush1.msra.mxu0 0.0
    %920 = vmatprep.subr.mxu0 0.0
    %921 = vmatpush1.msra.mxu0 0.0
    %922 = vmatprep.subr.mxu0 0.0
    %923 = vmatpush1.msra.mxu0 0.0
    %924 = vmatprep.subr.mxu0 0.0
    %925 = vmatpush1.msra.mxu0 0.0
    %926 = vmatprep.subr.mxu0 0.0
    %927 = vmatpush1.msra.mxu0 0.0
    %928 = vmatprep.subr.mxu0 0.0
    %929 = vmatpush1.msra.mxu0 0.0
    %930 = vmatprep.subr.mxu0 0.0
    %931 = vmatpush1.msra.mxu0 0.0
    %932 = vmatprep.subr.mxu0 0.0
    %933 = vmatpush1.msra.mxu0 0.0
    %934 = vmatprep.subr.mxu0 0.0
    %935 = vmatpush1.msra.mxu0 0.0
    %936 = vmatprep.subr.mxu0 0.0
    %937 = vmatpush1.msra.mxu0 0.0
    %938 = vmatprep.subr.mxu0 0.0
    %939 = vmatpush1.msra.mxu0 0.0
    %940 = vmatprep.subr.mxu0 0.0
    %941 = vmatpush1.msra.mxu0 0.0
    %942 = vmatprep.subr.mxu0 0.0
    %943 = vmatpush1.msra.mxu0 0.0
    %944 = vmatprep.subr.mxu0 0.0
    %945 = vmatpush1.msra.mxu0 0.0
    %946 = vmatprep.subr.mxu0 0.0
    %947 = vmatpush1.msra.mxu0 0.0
    %948 = vmatprep.mubr.f32.mxu0 0.0
    %949 = vmatmul.mubr.f32.gmra.mrb[0].mxu0 %v867
    %v950 = vpop.f32.mrb[0].mxu0
    %v951 = vadd.f32 %v749, %v950
    %v952 = vpop.f32.mrb[0].mxu0
    %953 = vdwg.mxu0
    %v954 = vtanh.pop %v951
    %v955 = vsub.f32 %v954, %v506
    %v956 = vmul.f32 %v866, %v955
    %v957 = vadd.f32 %v506, %v956
    %v959 = vcombine.high %v957, %v957
    %v961 = vunpack.c.l.s4 1966171168
    %v962 = vunpack.c.0.s8 %v961
    %v963 = vlaneseq
    %v964 = vshrl.u32 %v963, 7
    %v965 = vsub.s32 %v962, %v964
    %v966 = vrot.slane %v957, %v965
    %v968 = vunpack.c.l.s4 1966171168
    %v969 = vunpack.c.0.s8 %v968
    %v970 = vlaneseq
    %v971 = vshrl.u32 %v970, 7
    %v972 = vsub.s32 %v969, %v971
    %v973 = vrot.slane %v959, %v972
    %v974 = vcombine.high %v966, %v966
    %v975 = vcombine.high %v973, %v973
    %v977 = vunpack.c.l.s4 1966171168
    %v978 = vunpack.c.0.s8 %v977
    %v979 = vlaneseq
    %v980 = vshrl.u32 %v979, 7
    %v981 = vsub.s32 %v978, %v980
    %v982 = vrot.slane %v966, %v981
    %v984 = vunpack.c.l.s4 1966171168
    %v985 = vunpack.c.0.s8 %v984
    %v986 = vlaneseq
    %v987 = vshrl.u32 %v986, 7
    %v988 = vsub.s32 %v985, %v987
    %v989 = vrot.slane %v973, %v988
    %v991 = vunpack.c.l.s4 1966171168
    %v992 = vunpack.c.0.s8 %v991
    %v993 = vlaneseq
    %v994 = vshrl.u32 %v993, 7
    %v995 = vsub.s32 %v992, %v994
    %v996 = vrot.slane %v974, %v995
    %v998 = vunpack.c.l.s4 1966171168
    %v999 = vunpack.c.0.s8 %v998
    %v1000 = vlaneseq
    %v1001 = vshrl.u32 %v1000, 7
    %v1002 = vsub.s32 %v999, %v1001
    %v1003 = vrot.slane %v975, %v1002
    %v1004 = vcombine.high %v982, %v982
    %v1005 = vcombine.high %v989, %v989
    %v1006 = vcombine.high %v996, %v996
    %v1007 = vcombine.high %v1003, %v1003
    %1016 = vst [vmem:[#allocation12 + $0x1] sm:$0x1] %v982
    %1017 = vst [vmem:[#allocation12 + $0x5] sm:$0x1] %v996
    %1018 = vst [vmem:[#allocation12 + $0x9] sm:$0x1] %v1004
    %1019 = vst [vmem:[#allocation12 + $0xd] sm:$0x1] %v1006
    %1020 = vst [vmem:[#allocation12 + $0x11] sm:$0x1] %v989
    %1021 = vst [vmem:[#allocation12 + $0x15] sm:$0x1] %v1003
    %1022 = vst [vmem:[#allocation12 + $0x19] sm:$0x1] %v1005
    %1023 = vst [vmem:[#allocation12 + $0x1d] sm:$0x1] %v1007
    %v1024 = vld [vmem:[#allocation3 + $0x2] sm:$0x1]
    %v1025 = vld [vmem:[#allocation3 + $0x6] sm:$0x1]
    %v1026 = vld [vmem:[#allocation3 + $0xa] sm:$0x1]
    %v1027 = vld [vmem:[#allocation3 + $0xe] sm:$0x1]
    %v1028 = vld [vmem:[#allocation3 + $0x12] sm:$0x1]
    %v1029 = vld [vmem:[#allocation3 + $0x16] sm:$0x1]
    %v1030 = vld [vmem:[#allocation3 + $0x1a] sm:$0x1]
    %v1031 = vld [vmem:[#allocation3 + $0x1e] sm:$0x1]
    %v1032 = vld [vmem:[#allocation8] sm:$0xff]
    %v1033 = vld [vmem:[#allocation8 + $0x8] sm:$0xff]
    %v1034 = vld [vmem:[#allocation8 + $0x10] sm:$0xff]
    %v1035 = vld [vmem:[#allocation8 + $0x18] sm:$0xff]
    %v1036 = vld [vmem:[#allocation8 + $0x20] sm:$0xff]
    %v1037 = vld [vmem:[#allocation8 + $0x28] sm:$0xff]
    %v1046 = vrot.slane %v1025, 7
    %v1047 = vsel %vm137, %v1046, %v1024
    %v1048 = vrot.slane %v1026, 6
    %v1049 = vsel %vm140, %v1048, %v1047
    %v1050 = vrot.slane %v1027, 5
    %v1051 = vsel %vm143, %v1050, %v1049
    %v1052 = vrot.slane %v1028, 4
    %v1053 = vsel %vm146, %v1052, %v1051
    %v1054 = vrot.slane %v1029, 3
    %v1055 = vsel %vm149, %v1054, %v1053
    %v1056 = vrot.slane %v1030, 2
    %v1057 = vsel %vm152, %v1056, %v1055
    %v1058 = vrot.slane %v1031, 1
    %v1059 = vsel %vm155, %v1058, %v1057
    %v1060 = vsel %vm157, %v1059, 0
    %1062 = vmatprep.subr.mxu0 %v1033
    %1063 = vmatpush1.msra.mxu0 %v1032
    %1064 = vmatprep.subr.mxu0 %v1036
    %1065 = vmatpush1.msra.mxu0 %v1035
    %1066 = vmatprep.subr.mxu0 0.0
    %1067 = vmatpush1.msra.mxu0 0.0
    %1068 = vmatprep.subr.mxu0 0.0
    %1069 = vmatpush1.msra.mxu0 0.0
    %1070 = vmatprep.subr.mxu0 0.0
    %1071 = vmatpush1.msra.mxu0 0.0
    %1072 = vmatprep.subr.mxu0 0.0
    %1073 = vmatpush1.msra.mxu0 0.0
    %1074 = vmatprep.subr.mxu0 0.0
    %1075 = vmatpush1.msra.mxu0 0.0
    %1076 = vmatprep.subr.mxu0 0.0
    %1077 = vmatpush1.msra.mxu0 0.0
    %1078 = vmatprep.subr.mxu0 0.0
    %1079 = vmatpush1.msra.mxu0 0.0
    %1080 = vmatprep.subr.mxu0 0.0
    %1081 = vmatpush1.msra.mxu0 0.0
    %1082 = vmatprep.subr.mxu0 0.0
    %1083 = vmatpush1.msra.mxu0 0.0
    %1084 = vmatprep.subr.mxu0 0.0
    %1085 = vmatpush1.msra.mxu0 0.0
    %1086 = vmatprep.subr.mxu0 0.0
    %1087 = vmatpush1.msra.mxu0 0.0
    %1088 = vmatprep.subr.mxu0 0.0
    %1089 = vmatpush1.msra.mxu0 0.0
    %1090 = vmatprep.subr.mxu0 0.0
    %1091 = vmatpush1.msra.mxu0 0.0
    %1092 = vmatprep.subr.mxu0 0.0
    %1093 = vmatpush1.msra.mxu0 0.0
    %1094 = vmatprep.subr.mxu0 0.0
    %1095 = vmatpush1.msra.mxu0 0.0
    %1096 = vmatprep.subr.mxu0 0.0
    %1097 = vmatpush1.msra.mxu0 0.0
    %1098 = vmatprep.subr.mxu0 0.0
    %1099 = vmatpush1.msra.mxu0 0.0
    %1100 = vmatprep.subr.mxu0 0.0
    %1101 = vmatpush1.msra.mxu0 0.0
    %1102 = vmatprep.subr.mxu0 0.0
    %1103 = vmatpush1.msra.mxu0 0.0
    %1104 = vmatprep.subr.mxu0 0.0
    %1105 = vmatpush1.msra.mxu0 0.0
    %1106 = vmatprep.subr.mxu0 0.0
    %1107 = vmatpush1.msra.mxu0 0.0
    %1108 = vmatprep.subr.mxu0 0.0
    %1109 = vmatpush1.msra.mxu0 0.0
    %1110 = vmatprep.subr.mxu0 0.0
    %1111 = vmatpush1.msra.mxu0 0.0
    %1112 = vmatprep.subr.mxu0 0.0
    %1113 = vmatpush1.msra.mxu0 0.0
    %1114 = vmatprep.subr.mxu0 0.0
    %1115 = vmatpush1.msra.mxu0 0.0
    %1116 = vmatprep.subr.mxu0 0.0
    %1117 = vmatpush1.msra.mxu0 0.0
    %1118 = vmatprep.subr.mxu0 0.0
    %1119 = vmatpush1.msra.mxu0 0.0
    %1120 = vmatprep.subr.mxu0 0.0
    %1121 = vmatpush1.msra.mxu0 0.0
    %1122 = vmatprep.subr.mxu0 0.0
    %1123 = vmatpush1.msra.mxu0 0.0
    %1124 = vmatprep.subr.mxu0 0.0
    %1125 = vmatpush1.msra.mxu0 0.0
    %1126 = vmatprep.mubr.f32.mxu0 0.0
    %1127 = vmatmul.mubr.f32.gmra.mrb[0].mxu0 %v1060
    %v1128 = vpop.f32.mrb[0].mxu0
    %v1129 = vadd.f32 %v116, %v1128
    %v1130 = vpop.f32.mrb[0].mxu0
    %v1131 = vadd.f32 %v120, %v1130
    %1132 = vdwg.mxu0
    %1133 = vmatprep.subr.mxu0 0.0
    %1134 = vmatpush1.msra.mxu0 %v1034
    %1135 = vmatprep.subr.mxu0 0.0
    %1136 = vmatpush1.msra.mxu0 %v1037
    %1137 = vmatprep.subr.mxu0 0.0
    %1138 = vmatpush1.msra.mxu0 0.0
    %1139 = vmatprep.subr.mxu0 0.0
    %1140 = vmatpush1.msra.mxu0 0.0
    %1141 = vmatprep.subr.mxu0 0.0
    %1142 = vmatpush1.msra.mxu0 0.0
    %1143 = vmatprep.subr.mxu0 0.0
    %1144 = vmatpush1.msra.mxu0 0.0
    %1145 = vmatprep.subr.mxu0 0.0
    %1146 = vmatpush1.msra.mxu0 0.0
    %1147 = vmatprep.subr.mxu0 0.0
    %1148 = vmatpush1.msra.mxu0 0.0
    %1149 = vmatprep.subr.mxu0 0.0
    %1150 = vmatpush1.msra.mxu0 0.0
    %1151 = vmatprep.subr.mxu0 0.0
    %1152 = vmatpush1.msra.mxu0 0.0
    %1153 = vmatprep.subr.mxu0 0.0
    %1154 = vmatpush1.msra.mxu0 0.0
    %1155 = vmatprep.subr.mxu0 0.0
    %1156 = vmatpush1.msra.mxu0 0.0
    %1157 = vmatprep.subr.mxu0 0.0
    %1158 = vmatpush1.msra.mxu0 0.0
    %1159 = vmatprep.subr.mxu0 0.0
    %1160 = vmatpush1.msra.mxu0 0.0
    %1161 = vmatprep.subr.mxu0 0.0
    %1162 = vmatpush1.msra.mxu0 0.0
    %1163 = vmatprep.subr.mxu0 0.0
    %1164 = vmatpush1.msra.mxu0 0.0
    %1165 = vmatprep.subr.mxu0 0.0
    %1166 = vmatpush1.msra.mxu0 0.0
    %1167 = vmatprep.subr.mxu0 0.0
    %1168 = vmatpush1.msra.mxu0 0.0
    %1169 = vmatprep.subr.mxu0 0.0
    %1170 = vmatpush1.msra.mxu0 0.0
    %1171 = vmatprep.subr.mxu0 0.0
    %1172 = vmatpush1.msra.mxu0 0.0
    %1173 = vmatprep.subr.mxu0 0.0
    %1174 = vmatpush1.msra.mxu0 0.0
    %1175 = vmatprep.subr.mxu0 0.0
    %1176 = vmatpush1.msra.mxu0 0.0
    %1177 = vmatprep.subr.mxu0 0.0
    %1178 = vmatpush1.msra.mxu0 0.0
    %1179 = vmatprep.subr.mxu0 0.0
    %1180 = vmatpush1.msra.mxu0 0.0
    %1181 = vmatprep.subr.mxu0 0.0
    %1182 = vmatpush1.msra.mxu0 0.0
    %1183 = vmatprep.subr.mxu0 0.0
    %1184 = vmatpush1.msra.mxu0 0.0
    %1185 = vmatprep.subr.mxu0 0.0
    %1186 = vmatpush1.msra.mxu0 0.0
    %1187 = vmatprep.subr.mxu0 0.0
    %1188 = vmatpush1.msra.mxu0 0.0
    %1189 = vmatprep.subr.mxu0 0.0
    %1190 = vmatpush1.msra.mxu0 0.0
    %1191 = vmatprep.subr.mxu0 0.0
    %1192 = vmatpush1.msra.mxu0 0.0
    %1193 = vmatprep.subr.mxu0 0.0
    %1194 = vmatpush1.msra.mxu0 0.0
    %1195 = vmatprep.subr.mxu0 0.0
    %1196 = vmatpush1.msra.mxu0 0.0
    %1197 = vmatprep.mubr.f32.mxu0 0.0
    %1198 = vmatmul.mubr.f32.gmra.mrb[0].mxu0 %v1060
    %v1199 = vpop.f32.mrb[0].mxu0
    %v1200 = vadd.f32 %v124, %v1199
    %v1201 = vpop.f32.mrb[0].mxu0
    %1202 = vdwg.mxu0
    %v1203 = vld [vmem:[#allocation9] sm:$0xff]
    %v1204 = vld [vmem:[#allocation9 + $0x8] sm:$0xff]
    %v1205 = vld [vmem:[#allocation9 + $0x10] sm:$0xff]
    %v1206 = vld [vmem:[#allocation9 + $0x18] sm:$0xff]
    %v1207 = vld [vmem:[#allocation9 + $0x20] sm:$0xff]
    %v1208 = vld [vmem:[#allocation9 + $0x28] sm:$0xff]
    %v1209 = vld [vmem:[#allocation9 + $0x30] sm:$0xff]
    %v1210 = vld [vmem:[#allocation9 + $0x38] sm:$0xff]
    %v1211 = vld [vmem:[#allocation9 + $0x40] sm:$0xff]
    %v1212 = vld [vmem:[#allocation9 + $0x48] sm:$0xff]
    %v1213 = vld [vmem:[#allocation9 + $0x50] sm:$0xff]
    %v1214 = vld [vmem:[#allocation9 + $0x58] sm:$0xff]
    %v1215 = vld [vmem:[#allocation9 + $0x60] sm:$0xff]
    %v1216 = vld [vmem:[#allocation9 + $0x68] sm:$0xff]
    %v1217 = vld [vmem:[#allocation9 + $0x70] sm:$0xff]
    %v1218 = vld [vmem:[#allocation9 + $0x78] sm:$0xff]
    %v1219 = vld [vmem:[#allocation9 + $0x80] sm:$0xff]
    %v1220 = vld [vmem:[#allocation9 + $0x88] sm:$0xff]
    %v1221 = vld [vmem:[#allocation9 + $0x90] sm:$0xff]
    %v1222 = vld [vmem:[#allocation9 + $0x98] sm:$0xff]
    %v1223 = vld [vmem:[#allocation9 + $0xa0] sm:$0xff]
    %v1224 = vld [vmem:[#allocation9 + $0xa8] sm:$0xff]
    %v1225 = vld [vmem:[#allocation9 + $0xb0] sm:$0xff]
    %v1226 = vld [vmem:[#allocation9 + $0xb8] sm:$0xff]
    %v1227 = vld [vmem:[#allocation9 + $0xc0] sm:$0xff]
    %v1228 = vld [vmem:[#allocation9 + $0xc8] sm:$0xff]
    %v1229 = vld [vmem:[#allocation9 + $0xd0] sm:$0xff]
    %v1230 = vld [vmem:[#allocation9 + $0xd8] sm:$0xff]
    %v1231 = vld [vmem:[#allocation9 + $0xe0] sm:$0xff]
    %v1232 = vld [vmem:[#allocation9 + $0xe8] sm:$0xff]
    %v1233 = vld [vmem:[#allocation9 + $0xf0] sm:$0xff]
    %v1234 = vld [vmem:[#allocation9 + $0xf8] sm:$0xff]
    %1235 = vmatprep.subr.mxu0 %v1204
    %1236 = vmatpush1.msra.mxu0 %v1203
    %1237 = vmatprep.subr.mxu0 %v1206
    %1238 = vmatpush1.msra.mxu0 %v1205
    %1239 = vmatprep.subr.mxu0 %v1208
    %1240 = vmatpush1.msra.mxu0 %v1207
    %1241 = vmatprep.subr.mxu0 %v1210
    %1242 = vmatpush1.msra.mxu0 %v1209
    %1243 = vmatprep.subr.mxu0 %v1212
    %1244 = vmatpush1.msra.mxu0 %v1211
    %1245 = vmatprep.subr.mxu0 %v1214
    %1246 = vmatpush1.msra.mxu0 %v1213
    %1247 = vmatprep.subr.mxu0 %v1216
    %1248 = vmatpush1.msra.mxu0 %v1215
    %1249 = vmatprep.subr.mxu0 %v1218
    %1250 = vmatpush1.msra.mxu0 %v1217
    %1251 = vmatprep.subr.mxu0 %v1220
    %1252 = vmatpush1.msra.mxu0 %v1219
    %1253 = vmatprep.subr.mxu0 %v1222
    %1254 = vmatpush1.msra.mxu0 %v1221
    %1255 = vmatprep.subr.mxu0 %v1224
    %1256 = vmatpush1.msra.mxu0 %v1223
    %1257 = vmatprep.subr.mxu0 %v1226
    %1258 = vmatpush1.msra.mxu0 %v1225
    %1259 = vmatprep.subr.mxu0 %v1228
    %1260 = vmatpush1.msra.mxu0 %v1227
    %1261 = vmatprep.subr.mxu0 %v1230
    %1262 = vmatpush1.msra.mxu0 %v1229
    %1263 = vmatprep.subr.mxu0 %v1232
    %1264 = vmatpush1.msra.mxu0 %v1231
    %1265 = vmatprep.subr.mxu0 %v1234
    %1266 = vmatpush1.msra.mxu0 %v1233
    %1267 = vmatprep.subr.mxu0 0.0
    %1268 = vmatpush1.msra.mxu0 0.0
    %1269 = vmatprep.subr.mxu0 0.0
    %1270 = vmatpush1.msra.mxu0 0.0
    %1271 = vmatprep.subr.mxu0 0.0
    %1272 = vmatpush1.msra.mxu0 0.0
    %1273 = vmatprep.subr.mxu0 0.0
    %1274 = vmatpush1.msra.mxu0 0.0
    %1275 = vmatprep.subr.mxu0 0.0
    %1276 = vmatpush1.msra.mxu0 0.0
    %1277 = vmatprep.subr.mxu0 0.0
    %1278 = vmatpush1.msra.mxu0 0.0
    %1279 = vmatprep.subr.mxu0 0.0
    %1280 = vmatpush1.msra.mxu0 0.0
    %1281 = vmatprep.subr.mxu0 0.0
    %1282 = vmatpush1.msra.mxu0 0.0
    %1283 = vmatprep.subr.mxu0 0.0
    %1284 = vmatpush1.msra.mxu0 0.0
    %1285 = vmatprep.subr.mxu0 0.0
    %1286 = vmatpush1.msra.mxu0 0.0
    %1287 = vmatprep.subr.mxu0 0.0
    %1288 = vmatpush1.msra.mxu0 0.0
    %1289 = vmatprep.subr.mxu0 0.0
    %1290 = vmatpush1.msra.mxu0 0.0
    %1291 = vmatprep.subr.mxu0 0.0
    %1292 = vmatpush1.msra.mxu0 0.0
    %1293 = vmatprep.subr.mxu0 0.0
    %1294 = vmatpush1.msra.mxu0 0.0
    %1295 = vmatprep.subr.mxu0 0.0
    %1296 = vmatpush1.msra.mxu0 0.0
    %1297 = vmatprep.subr.mxu0 0.0
    %1298 = vmatpush1.msra.mxu0 0.0
    %1299 = vmatprep.mubr.f32.mxu0 0.0
    %1300 = vmatmul.mubr.f32.gmra.mrb[0].mxu0 %v957
    %v1301 = vpop.f32.mrb[0].mxu0
    %v1302 = vadd.f32 %v1129, %v1301
    %v1303 = vpop.f32.mrb[0].mxu0
    %v1304 = vadd.f32 %v1131, %v1303
    %1305 = vdwg.mxu0
    %v1306 = vxor.u32 %v1302, 2147483648
    %v1307 = vxor.u32 %v1304, 2147483648
    %v1308 = vmul.f32 %v1306, 1.442695
    %v1309 = vpow.pop %v1308
    %v1310 = vmul.f32 %v1307, 1.442695
    %v1311 = vpow.pop %v1310
    %v1312 = vadd.f32 %v1309, 1.0
    %v1313 = vadd.f32 %v1311, 1.0
    %v1314 = vrcp.pop %v1312
    %v1315 = vmul.f32 1.0, %v1314
    %v1316 = vrcp.pop %v1313
    %v1317 = vmul.f32 1.0, %v1316
    %v1318 = vmul.f32 %v1315, %v957
    %v1319 = vld [vmem:[#allocation11] sm:$0xff]
    %v1320 = vld [vmem:[#allocation11 + $0x8] sm:$0xff]
    %v1321 = vld [vmem:[#allocation11 + $0x10] sm:$0xff]
    %v1322 = vld [vmem:[#allocation11 + $0x18] sm:$0xff]
    %v1323 = vld [vmem:[#allocation11 + $0x20] sm:$0xff]
    %v1324 = vld [vmem:[#allocation11 + $0x28] sm:$0xff]
    %v1325 = vld [vmem:[#allocation11 + $0x30] sm:$0xff]
    %v1326 = vld [vmem:[#allocation11 + $0x38] sm:$0xff]
    %v1327 = vld [vmem:[#allocation11 + $0x40] sm:$0xff]
    %v1328 = vld [vmem:[#allocation11 + $0x48] sm:$0xff]
    %v1329 = vld [vmem:[#allocation11 + $0x50] sm:$0xff]
    %v1330 = vld [vmem:[#allocation11 + $0x58] sm:$0xff]
    %v1331 = vld [vmem:[#allocation11 + $0x60] sm:$0xff]
    %v1332 = vld [vmem:[#allocation11 + $0x68] sm:$0xff]
    %v1333 = vld [vmem:[#allocation11 + $0x70] sm:$0xff]
    %v1334 = vld [vmem:[#allocation11 + $0x78] sm:$0xff]
    %1335 = vmatprep.subr.mxu0 0.0
    %1336 = vmatpush1.msra.mxu0 %v1319
    %1337 = vmatprep.subr.mxu0 0.0
    %1338 = vmatpush1.msra.mxu0 %v1320
    %1339 = vmatprep.subr.mxu0 0.0
    %1340 = vmatpush1.msra.mxu0 %v1321
    %1341 = vmatprep.subr.mxu0 0.0
    %1342 = vmatpush1.msra.mxu0 %v1322
    %1343 = vmatprep.subr.mxu0 0.0
    %1344 = vmatpush1.msra.mxu0 %v1323
    %1345 = vmatprep.subr.mxu0 0.0
    %1346 = vmatpush1.msra.mxu0 %v1324
    %1347 = vmatprep.subr.mxu0 0.0
    %1348 = vmatpush1.msra.mxu0 %v1325
    %1349 = vmatprep.subr.mxu0 0.0
    %1350 = vmatpush1.msra.mxu0 %v1326
    %1351 = vmatprep.subr.mxu0 0.0
    %1352 = vmatpush1.msra.mxu0 %v1327
    %1353 = vmatprep.subr.mxu0 0.0
    %1354 = vmatpush1.msra.mxu0 %v1328
    %1355 = vmatprep.subr.mxu0 0.0
    %1356 = vmatpush1.msra.mxu0 %v1329
    %1357 = vmatprep.subr.mxu0 0.0
    %1358 = vmatpush1.msra.mxu0 %v1330
    %1359 = vmatprep.subr.mxu0 0.0
    %1360 = vmatpush1.msra.mxu0 %v1331
    %1361 = vmatprep.subr.mxu0 0.0
    %1362 = vmatpush1.msra.mxu0 %v1332
    %1363 = vmatprep.subr.mxu0 0.0
    %1364 = vmatpush1.msra.mxu0 %v1333
    %1365 = vmatprep.subr.mxu0 0.0
    %1366 = vmatpush1.msra.mxu0 %v1334
    %1367 = vmatprep.subr.mxu0 0.0
    %1368 = vmatpush1.msra.mxu0 0.0
    %1369 = vmatprep.subr.mxu0 0.0
    %1370 = vmatpush1.msra.mxu0 0.0
    %1371 = vmatprep.subr.mxu0 0.0
    %1372 = vmatpush1.msra.mxu0 0.0
    %1373 = vmatprep.subr.mxu0 0.0
    %1374 = vmatpush1.msra.mxu0 0.0
    %1375 = vmatprep.subr.mxu0 0.0
    %1376 = vmatpush1.msra.mxu0 0.0
    %1377 = vmatprep.subr.mxu0 0.0
    %1378 = vmatpush1.msra.mxu0 0.0
    %1379 = vmatprep.subr.mxu0 0.0
    %1380 = vmatpush1.msra.mxu0 0.0
    %1381 = vmatprep.subr.mxu0 0.0
    %1382 = vmatpush1.msra.mxu0 0.0
    %1383 = vmatprep.subr.mxu0 0.0
    %1384 = vmatpush1.msra.mxu0 0.0
    %1385 = vmatprep.subr.mxu0 0.0
    %1386 = vmatpush1.msra.mxu0 0.0
    %1387 = vmatprep.subr.mxu0 0.0
    %1388 = vmatpush1.msra.mxu0 0.0
    %1389 = vmatprep.subr.mxu0 0.0
    %1390 = vmatpush1.msra.mxu0 0.0
    %1391 = vmatprep.subr.mxu0 0.0
    %1392 = vmatpush1.msra.mxu0 0.0
    %1393 = vmatprep.subr.mxu0 0.0
    %1394 = vmatpush1.msra.mxu0 0.0
    %1395 = vmatprep.subr.mxu0 0.0
    %1396 = vmatpush1.msra.mxu0 0.0
    %1397 = vmatprep.subr.mxu0 0.0
    %1398 = vmatpush1.msra.mxu0 0.0
    %1399 = vmatprep.mubr.f32.mxu0 0.0
    %1400 = vmatmul.mubr.f32.gmra.mrb[0].mxu0 %v1318
    %v1401 = vpop.f32.mrb[0].mxu0
    %v1402 = vadd.f32 %v1200, %v1401
    %v1403 = vpop.f32.mrb[0].mxu0
    %1404 = vdwg.mxu0
    %v1405 = vtanh.pop %v1402
    %v1406 = vsub.f32 %v1405, %v957
    %v1407 = vmul.f32 %v1317, %v1406
    %v1408 = vadd.f32 %v957, %v1407
    %v1410 = vcombine.high %v1408, %v1408
    %v1412 = vunpack.c.l.s4 1966171168
    %v1413 = vunpack.c.0.s8 %v1412
    %v1414 = vlaneseq
    %v1415 = vshrl.u32 %v1414, 7
    %v1416 = vsub.s32 %v1413, %v1415
    %v1417 = vrot.slane %v1408, %v1416
    %v1419 = vunpack.c.l.s4 1966171168
    %v1420 = vunpack.c.0.s8 %v1419
    %v1421 = vlaneseq
    %v1422 = vshrl.u32 %v1421, 7
    %v1423 = vsub.s32 %v1420, %v1422
    %v1424 = vrot.slane %v1410, %v1423
    %v1425 = vcombine.high %v1417, %v1417
    %v1426 = vcombine.high %v1424, %v1424
    %v1428 = vunpack.c.l.s4 1966171168
    %v1429 = vunpack.c.0.s8 %v1428
    %v1430 = vlaneseq
    %v1431 = vshrl.u32 %v1430, 7
    %v1432 = vsub.s32 %v1429, %v1431
    %v1433 = vrot.slane %v1417, %v1432
    %v1435 = vunpack.c.l.s4 1966171168
    %v1436 = vunpack.c.0.s8 %v1435
    %v1437 = vlaneseq
    %v1438 = vshrl.u32 %v1437, 7
    %v1439 = vsub.s32 %v1436, %v1438
    %v1440 = vrot.slane %v1424, %v1439
    %v1442 = vunpack.c.l.s4 1966171168
    %v1443 = vunpack.c.0.s8 %v1442
    %v1444 = vlaneseq
    %v1445 = vshrl.u32 %v1444, 7
    %v1446 = vsub.s32 %v1443, %v1445
    %v1447 = vrot.slane %v1425, %v1446
    %v1449 = vunpack.c.l.s4 1966171168
    %v1450 = vunpack.c.0.s8 %v1449
    %v1451 = vlaneseq
    %v1452 = vshrl.u32 %v1451, 7
    %v1453 = vsub.s32 %v1450, %v1452
    %v1454 = vrot.slane %v1426, %v1453
    %v1455 = vcombine.high %v1433, %v1433
    %v1456 = vcombine.high %v1440, %v1440
    %v1457 = vcombine.high %v1447, %v1447
    %v1458 = vcombine.high %v1454, %v1454
    %1467 = vst [vmem:[#allocation12 + $0x2] sm:$0x1] %v1433
    %1468 = vst [vmem:[#allocation12 + $0x6] sm:$0x1] %v1447
    %1469 = vst [vmem:[#allocation12 + $0xa] sm:$0x1] %v1455
    %1470 = vst [vmem:[#allocation12 + $0xe] sm:$0x1] %v1457
    %1471 = vst [vmem:[#allocation12 + $0x12] sm:$0x1] %v1440
    %1472 = vst [vmem:[#allocation12 + $0x16] sm:$0x1] %v1454
    %1473 = vst [vmem:[#allocation12 + $0x1a] sm:$0x1] %v1456
    %1474 = vst [vmem:[#allocation12 + $0x1e] sm:$0x1] %v1458
    %v1475 = vld [vmem:[#allocation3 + $0x3] sm:$0x1]
    %v1476 = vld [vmem:[#allocation3 + $0x7] sm:$0x1]
    %v1477 = vld [vmem:[#allocation3 + $0xb] sm:$0x1]
    %v1478 = vld [vmem:[#allocation3 + $0xf] sm:$0x1]
    %v1479 = vld [vmem:[#allocation3 + $0x13] sm:$0x1]
    %v1480 = vld [vmem:[#allocation3 + $0x17] sm:$0x1]
    %v1481 = vld [vmem:[#allocation3 + $0x1b] sm:$0x1]
    %v1482 = vld [vmem:[#allocation3 + $0x1f] sm:$0x1]
    %v1483 = vld [vmem:[#allocation8] sm:$0xff]
    %v1484 = vld [vmem:[#allocation8 + $0x8] sm:$0xff]
    %v1485 = vld [vmem:[#allocation8 + $0x10] sm:$0xff]
    %v1486 = vld [vmem:[#allocation8 + $0x18] sm:$0xff]
    %v1487 = vld [vmem:[#allocation8 + $0x20] sm:$0xff]
    %v1488 = vld [vmem:[#allocation8 + $0x28] sm:$0xff]
    %v1497 = vrot.slane %v1476, 7
    %v1498 = vsel %vm137, %v1497, %v1475
    %v1499 = vrot.slane %v1477, 6
    %v1500 = vsel %vm140, %v1499, %v1498
    %v1501 = vrot.slane %v1478, 5
    %v1502 = vsel %vm143, %v1501, %v1500
    %v1503 = vrot.slane %v1479, 4
    %v1504 = vsel %vm146, %v1503, %v1502
    %v1505 = vrot.slane %v1480, 3
    %v1506 = vsel %vm149, %v1505, %v1504
    %v1507 = vrot.slane %v1481, 2
    %v1508 = vsel %vm152, %v1507, %v1506
    %v1509 = vrot.slane %v1482, 1
    %v1510 = vsel %vm155, %v1509, %v1508
    %v1511 = vsel %vm157, %v1510, 0
    %1513 = vmatprep.subr.mxu0 %v1484
    %1514 = vmatpush1.msra.mxu0 %v1483
    %1515 = vmatprep.subr.mxu0 %v1487
    %1516 = vmatpush1.msra.mxu0 %v1486
    %1517 = vmatprep.subr.mxu0 0.0
    %1518 = vmatpush1.msra.mxu0 0.0
    %1519 = vmatprep.subr.mxu0 0.0
    %1520 = vmatpush1.msra.mxu0 0.0
    %1521 = vmatprep.subr.mxu0 0.0
    %1522 = vmatpush1.msra.mxu0 0.0
    %1523 = vmatprep.subr.mxu0 0.0
    %1524 = vmatpush1.msra.mxu0 0.0
    %1525 = vmatprep.subr.mxu0 0.0
    %1526 = vmatpush1.msra.mxu0 0.0
    %1527 = vmatprep.subr.mxu0 0.0
    %1528 = vmatpush1.msra.mxu0 0.0
    %1529 = vmatprep.subr.mxu0 0.0
    %1530 = vmatpush1.msra.mxu0 0.0
    %1531 = vmatprep.subr.mxu0 0.0
    %1532 = vmatpush1.msra.mxu0 0.0
    %1533 = vmatprep.subr.mxu0 0.0
    %1534 = vmatpush1.msra.mxu0 0.0
    %1535 = vmatprep.subr.mxu0 0.0
    %1536 = vmatpush1.msra.mxu0 0.0
    %1537 = vmatprep.subr.mxu0 0.0
    %1538 = vmatpush1.msra.mxu0 0.0
    %1539 = vmatprep.subr.mxu0 0.0
    %1540 = vmatpush1.msra.mxu0 0.0
    %1541 = vmatprep.subr.mxu0 0.0
    %1542 = vmatpush1.msra.mxu0 0.0
    %1543 = vmatprep.subr.mxu0 0.0
    %1544 = vmatpush1.msra.mxu0 0.0
    %1545 = vmatprep.subr.mxu0 0.0
    %1546 = vmatpush1.msra.mxu0 0.0
    %1547 = vmatprep.subr.mxu0 0.0
    %1548 = vmatpush1.msra.mxu0 0.0
    %1549 = vmatprep.subr.mxu0 0.0
    %1550 = vmatpush1.msra.mxu0 0.0
    %1551 = vmatprep.subr.mxu0 0.0
    %1552 = vmatpush1.msra.mxu0 0.0
    %1553 = vmatprep.subr.mxu0 0.0
    %1554 = vmatpush1.msra.mxu0 0.0
    %1555 = vmatprep.subr.mxu0 0.0
    %1556 = vmatpush1.msra.mxu0 0.0
    %1557 = vmatprep.subr.mxu0 0.0
    %1558 = vmatpush1.msra.mxu0 0.0
    %1559 = vmatprep.subr.mxu0 0.0
    %1560 = vmatpush1.msra.mxu0 0.0
    %1561 = vmatprep.subr.mxu0 0.0
    %1562 = vmatpush1.msra.mxu0 0.0
    %1563 = vmatprep.subr.mxu0 0.0
    %1564 = vmatpush1.msra.mxu0 0.0
    %1565 = vmatprep.subr.mxu0 0.0
    %1566 = vmatpush1.msra.mxu0 0.0
    %1567 = vmatprep.subr.mxu0 0.0
    %1568 = vmatpush1.msra.mxu0 0.0
    %1569 = vmatprep.subr.mxu0 0.0
    %1570 = vmatpush1.msra.mxu0 0.0
    %1571 = vmatprep.subr.mxu0 0.0
    %1572 = vmatpush1.msra.mxu0 0.0
    %1573 = vmatprep.subr.mxu0 0.0
    %1574 = vmatpush1.msra.mxu0 0.0
    %1575 = vmatprep.subr.mxu0 0.0
    %1576 = vmatpush1.msra.mxu0 0.0
    %1577 = vmatprep.mubr.f32.mxu0 0.0
    %1578 = vmatmul.mubr.f32.gmra.mrb[0].mxu0 %v1511
    %v1579 = vpop.f32.mrb[0].mxu0
    %v1580 = vadd.f32 %v116, %v1579
    %v1581 = vpop.f32.mrb[0].mxu0
    %v1582 = vadd.f32 %v120, %v1581
    %1583 = vdwg.mxu0
    %1584 = vmatprep.subr.mxu0 0.0
    %1585 = vmatpush1.msra.mxu0 %v1485
    %1586 = vmatprep.subr.mxu0 0.0
    %1587 = vmatpush1.msra.mxu0 %v1488
    %1588 = vmatprep.subr.mxu0 0.0
    %1589 = vmatpush1.msra.mxu0 0.0
    %1590 = vmatprep.subr.mxu0 0.0
    %1591 = vmatpush1.msra.mxu0 0.0
    %1592 = vmatprep.subr.mxu0 0.0
    %1593 = vmatpush1.msra.mxu0 0.0
    %1594 = vmatprep.subr.mxu0 0.0
    %1595 = vmatpush1.msra.mxu0 0.0
    %1596 = vmatprep.subr.mxu0 0.0
    %1597 = vmatpush1.msra.mxu0 0.0
    %1598 = vmatprep.subr.mxu0 0.0
    %1599 = vmatpush1.msra.mxu0 0.0
    %1600 = vmatprep.subr.mxu0 0.0
    %1601 = vmatpush1.msra.mxu0 0.0
    %1602 = vmatprep.subr.mxu0 0.0
    %1603 = vmatpush1.msra.mxu0 0.0
    %1604 = vmatprep.subr.mxu0 0.0
    %1605 = vmatpush1.msra.mxu0 0.0
    %1606 = vmatprep.subr.mxu0 0.0
    %1607 = vmatpush1.msra.mxu0 0.0
    %1608 = vmatprep.subr.mxu0 0.0
    %1609 = vmatpush1.msra.mxu0 0.0
    %1610 = vmatprep.subr.mxu0 0.0
    %1611 = vmatpush1.msra.mxu0 0.0
    %1612 = vmatprep.subr.mxu0 0.0
    %1613 = vmatpush1.msra.mxu0 0.0
    %1614 = vmatprep.subr.mxu0 0.0
    %1615 = vmatpush1.msra.mxu0 0.0
    %1616 = vmatprep.subr.mxu0 0.0
    %1617 = vmatpush1.msra.mxu0 0.0
    %1618 = vmatprep.subr.mxu0 0.0
    %1619 = vmatpush1.msra.mxu0 0.0
    %1620 = vmatprep.subr.mxu0 0.0
    %1621 = vmatpush1.msra.mxu0 0.0
    %1622 = vmatprep.subr.mxu0 0.0
    %1623 = vmatpush1.msra.mxu0 0.0
    %1624 = vmatprep.subr.mxu0 0.0
    %1625 = vmatpush1.msra.mxu0 0.0
    %1626 = vmatprep.subr.mxu0 0.0
    %1627 = vmatpush1.msra.mxu0 0.0
    %1628 = vmatprep.subr.mxu0 0.0
    %1629 = vmatpush1.msra.mxu0 0.0
    %1630 = vmatprep.subr.mxu0 0.0
    %1631 = vmatpush1.msra.mxu0 0.0
    %1632 = vmatprep.subr.mxu0 0.0
    %1633 = vmatpush1.msra.mxu0 0.0
    %1634 = vmatprep.subr.mxu0 0.0
    %1635 = vmatpush1.msra.mxu0 0.0
    %1636 = vmatprep.subr.mxu0 0.0
    %1637 = vmatpush1.msra.mxu0 0.0
    %1638 = vmatprep.subr.mxu0 0.0
    %1639 = vmatpush1.msra.mxu0 0.0
    %1640 = vmatprep.subr.mxu0 0.0
    %1641 = vmatpush1.msra.mxu0 0.0
    %1642 = vmatprep.subr.mxu0 0.0
    %1643 = vmatpush1.msra.mxu0 0.0
    %1644 = vmatprep.subr.mxu0 0.0
    %1645 = vmatpush1.msra.mxu0 0.0
    %1646 = vmatprep.subr.mxu0 0.0
    %1647 = vmatpush1.msra.mxu0 0.0
    %1648 = vmatprep.mubr.f32.mxu0 0.0
    %1649 = vmatmul.mubr.f32.gmra.mrb[0].mxu0 %v1511
    %v1650 = vpop.f32.mrb[0].mxu0
    %v1651 = vadd.f32 %v124, %v1650
    %v1652 = vpop.f32.mrb[0].mxu0
    %1653 = vdwg.mxu0
    %v1654 = vld [vmem:[#allocation9] sm:$0xff]
    %v1655 = vld [vmem:[#allocation9 + $0x8] sm:$0xff]
    %v1656 = vld [vmem:[#allocation9 + $0x10] sm:$0xff]
    %v1657 = vld [vmem:[#allocation9 + $0x18] sm:$0xff]
    %v1658 = vld [vmem:[#allocation9 + $0x20] sm:$0xff]
    %v1659 = vld [vmem:[#allocation9 + $0x28] sm:$0xff]
    %v1660 = vld [vmem:[#allocation9 + $0x30] sm:$0xff]
    %v1661 = vld [vmem:[#allocation9 + $0x38] sm:$0xff]
    %v1662 = vld [vmem:[#allocation9 + $0x40] sm:$0xff]
    %v1663 = vld [vmem:[#allocation9 + $0x48] sm:$0xff]
    %v1664 = vld [vmem:[#allocation9 + $0x50] sm:$0xff]
    %v1665 = vld [vmem:[#allocation9 + $0x58] sm:$0xff]
    %v1666 = vld [vmem:[#allocation9 + $0x60] sm:$0xff]
    %v1667 = vld [vmem:[#allocation9 + $0x68] sm:$0xff]
    %v1668 = vld [vmem:[#allocation9 + $0x70] sm:$0xff]
    %v1669 = vld [vmem:[#allocation9 + $0x78] sm:$0xff]
    %v1670 = vld [vmem:[#allocation9 + $0x80] sm:$0xff]
    %v1671 = vld [vmem:[#allocation9 + $0x88] sm:$0xff]
    %v1672 = vld [vmem:[#allocation9 + $0x90] sm:$0xff]
    %v1673 = vld [vmem:[#allocation9 + $0x98] sm:$0xff]
    %v1674 = vld [vmem:[#allocation9 + $0xa0] sm:$0xff]
    %v1675 = vld [vmem:[#allocation9 + $0xa8] sm:$0xff]
    %v1676 = vld [vmem:[#allocation9 + $0xb0] sm:$0xff]
    %v1677 = vld [vmem:[#allocation9 + $0xb8] sm:$0xff]
    %v1678 = vld [vmem:[#allocation9 + $0xc0] sm:$0xff]
    %v1679 = vld [vmem:[#allocation9 + $0xc8] sm:$0xff]
    %v1680 = vld [vmem:[#allocation9 + $0xd0] sm:$0xff]
    %v1681 = vld [vmem:[#allocation9 + $0xd8] sm:$0xff]
    %v1682 = vld [vmem:[#allocation9 + $0xe0] sm:$0xff]
    %v1683 = vld [vmem:[#allocation9 + $0xe8] sm:$0xff]
    %v1684 = vld [vmem:[#allocation9 + $0xf0] sm:$0xff]
    %v1685 = vld [vmem:[#allocation9 + $0xf8] sm:$0xff]
    %1686 = vmatprep.subr.mxu0 %v1655
    %1687 = vmatpush1.msra.mxu0 %v1654
    %1688 = vmatprep.subr.mxu0 %v1657
    %1689 = vmatpush1.msra.mxu0 %v1656
    %1690 = vmatprep.subr.mxu0 %v1659
    %1691 = vmatpush1.msra.mxu0 %v1658
    %1692 = vmatprep.subr.mxu0 %v1661
    %1693 = vmatpush1.msra.mxu0 %v1660
    %1694 = vmatprep.subr.mxu0 %v1663
    %1695 = vmatpush1.msra.mxu0 %v1662
    %1696 = vmatprep.subr.mxu0 %v1665
    %1697 = vmatpush1.msra.mxu0 %v1664
    %1698 = vmatprep.subr.mxu0 %v1667
    %1699 = vmatpush1.msra.mxu0 %v1666
    %1700 = vmatprep.subr.mxu0 %v1669
    %1701 = vmatpush1.msra.mxu0 %v1668
    %1702 = vmatprep.subr.mxu0 %v1671
    %1703 = vmatpush1.msra.mxu0 %v1670
    %1704 = vmatprep.subr.mxu0 %v1673
    %1705 = vmatpush1.msra.mxu0 %v1672
    %1706 = vmatprep.subr.mxu0 %v1675
    %1707 = vmatpush1.msra.mxu0 %v1674
    %1708 = vmatprep.subr.mxu0 %v1677
    %1709 = vmatpush1.msra.mxu0 %v1676
    %1710 = vmatprep.subr.mxu0 %v1679
    %1711 = vmatpush1.msra.mxu0 %v1678
    %1712 = vmatprep.subr.mxu0 %v1681
    %1713 = vmatpush1.msra.mxu0 %v1680
    %1714 = vmatprep.subr.mxu0 %v1683
    %1715 = vmatpush1.msra.mxu0 %v1682
    %1716 = vmatprep.subr.mxu0 %v1685
    %1717 = vmatpush1.msra.mxu0 %v1684
    %1718 = vmatprep.subr.mxu0 0.0
    %1719 = vmatpush1.msra.mxu0 0.0
    %1720 = vmatprep.subr.mxu0 0.0
    %1721 = vmatpush1.msra.mxu0 0.0
    %1722 = vmatprep.subr.mxu0 0.0
    %1723 = vmatpush1.msra.mxu0 0.0
    %1724 = vmatprep.subr.mxu0 0.0
    %1725 = vmatpush1.msra.mxu0 0.0
    %1726 = vmatprep.subr.mxu0 0.0
    %1727 = vmatpush1.msra.mxu0 0.0
    %1728 = vmatprep.subr.mxu0 0.0
    %1729 = vmatpush1.msra.mxu0 0.0
    %1730 = vmatprep.subr.mxu0 0.0
    %1731 = vmatpush1.msra.mxu0 0.0
    %1732 = vmatprep.subr.mxu0 0.0
    %1733 = vmatpush1.msra.mxu0 0.0
    %1734 = vmatprep.subr.mxu0 0.0
    %1735 = vmatpush1.msra.mxu0 0.0
    %1736 = vmatprep.subr.mxu0 0.0
    %1737 = vmatpush1.msra.mxu0 0.0
    %1738 = vmatprep.subr.mxu0 0.0
    %1739 = vmatpush1.msra.mxu0 0.0
    %1740 = vmatprep.subr.mxu0 0.0
    %1741 = vmatpush1.msra.mxu0 0.0
    %1742 = vmatprep.subr.mxu0 0.0
    %1743 = vmatpush1.msra.mxu0 0.0
    %1744 = vmatprep.subr.mxu0 0.0
    %1745 = vmatpush1.msra.mxu0 0.0
    %1746 = vmatprep.subr.mxu0 0.0
    %1747 = vmatpush1.msra.mxu0 0.0
    %1748 = vmatprep.subr.mxu0 0.0
    %1749 = vmatpush1.msra.mxu0 0.0
    %1750 = vmatprep.mubr.f32.mxu0 0.0
    %1751 = vmatmul.mubr.f32.gmra.mrb[0].mxu0 %v1408
    %v1752 = vpop.f32.mrb[0].mxu0
    %v1753 = vadd.f32 %v1580, %v1752
    %v1754 = vpop.f32.mrb[0].mxu0
    %v1755 = vadd.f32 %v1582, %v1754
    %1756 = vdwg.mxu0
    %v1757 = vxor.u32 %v1753, 2147483648
    %v1758 = vxor.u32 %v1755, 2147483648
    %v1759 = vmul.f32 %v1757, 1.442695
    %v1760 = vpow.pop %v1759
    %v1761 = vmul.f32 %v1758, 1.442695
    %v1762 = vpow.pop %v1761
    %v1763 = vadd.f32 %v1760, 1.0
    %v1764 = vadd.f32 %v1762, 1.0
    %v1765 = vrcp.pop %v1763
    %v1766 = vmul.f32 1.0, %v1765
    %v1767 = vrcp.pop %v1764
    %v1768 = vmul.f32 1.0, %v1767
    %v1769 = vmul.f32 %v1766, %v1408
    %v1770 = vld [vmem:[#allocation11] sm:$0xff]
    %v1771 = vld [vmem:[#allocation11 + $0x8] sm:$0xff]
    %v1772 = vld [vmem:[#allocation11 + $0x10] sm:$0xff]
    %v1773 = vld [vmem:[#allocation11 + $0x18] sm:$0xff]
    %v1774 = vld [vmem:[#allocation11 + $0x20] sm:$0xff]
    %v1775 = vld [vmem:[#allocation11 + $0x28] sm:$0xff]
    %v1776 = vld [vmem:[#allocation11 + $0x30] sm:$0xff]
    %v1777 = vld [vmem:[#allocation11 + $0x38] sm:$0xff]
    %v1778 = vld [vmem:[#allocation11 + $0x40] sm:$0xff]
    %v1779 = vld [vmem:[#allocation11 + $0x48] sm:$0xff]
    %v1780 = vld [vmem:[#allocation11 + $0x50] sm:$0xff]
    %v1781 = vld [vmem:[#allocation11 + $0x58] sm:$0xff]
    %v1782 = vld [vmem:[#allocation11 + $0x60] sm:$0xff]
    %v1783 = vld [vmem:[#allocation11 + $0x68] sm:$0xff]
    %v1784 = vld [vmem:[#allocation11 + $0x70] sm:$0xff]
    %v1785 = vld [vmem:[#allocation11 + $0x78] sm:$0xff]
    %1786 = vmatprep.subr.mxu0 0.0
    %1787 = vmatpush1.msra.mxu0 %v1770
    %1788 = vmatprep.subr.mxu0 0.0
    %1789 = vmatpush1.msra.mxu0 %v1771
    %1790 = vmatprep.subr.mxu0 0.0
    %1791 = vmatpush1.msra.mxu0 %v1772
    %1792 = vmatprep.subr.mxu0 0.0
    %1793 = vmatpush1.msra.mxu0 %v1773
    %1794 = vmatprep.subr.mxu0 0.0
    %1795 = vmatpush1.msra.mxu0 %v1774
    %1796 = vmatprep.subr.mxu0 0.0
    %1797 = vmatpush1.msra.mxu0 %v1775
    %1798 = vmatprep.subr.mxu0 0.0
    %1799 = vmatpush1.msra.mxu0 %v1776
    %1800 = vmatprep.subr.mxu0 0.0
    %1801 = vmatpush1.msra.mxu0 %v1777
    %1802 = vmatprep.subr.mxu0 0.0
    %1803 = vmatpush1.msra.mxu0 %v1778
    %1804 = vmatprep.subr.mxu0 0.0
    %1805 = vmatpush1.msra.mxu0 %v1779
    %1806 = vmatprep.subr.mxu0 0.0
    %1807 = vmatpush1.msra.mxu0 %v1780
    %1808 = vmatprep.subr.mxu0 0.0
    %1809 = vmatpush1.msra.mxu0 %v1781
    %1810 = vmatprep.subr.mxu0 0.0
    %1811 = vmatpush1.msra.mxu0 %v1782
    %1812 = vmatprep.subr.mxu0 0.0
    %1813 = vmatpush1.msra.mxu0 %v1783
    %1814 = vmatprep.subr.mxu0 0.0
    %1815 = vmatpush1.msra.mxu0 %v1784
    %1816 = vmatprep.subr.mxu0 0.0
    %1817 = vmatpush1.msra.mxu0 %v1785
    %1818 = vmatprep.subr.mxu0 0.0
    %1819 = vmatpush1.msra.mxu0 0.0
    %1820 = vmatprep.subr.mxu0 0.0
    %1821 = vmatpush1.msra.mxu0 0.0
    %1822 = vmatprep.subr.mxu0 0.0
    %1823 = vmatpush1.msra.mxu0 0.0
    %1824 = vmatprep.subr.mxu0 0.0
    %1825 = vmatpush1.msra.mxu0 0.0
    %1826 = vmatprep.subr.mxu0 0.0
    %1827 = vmatpush1.msra.mxu0 0.0
    %1828 = vmatprep.subr.mxu0 0.0
    %1829 = vmatpush1.msra.mxu0 0.0
    %1830 = vmatprep.subr.mxu0 0.0
    %1831 = vmatpush1.msra.mxu0 0.0
    %1832 = vmatprep.subr.mxu0 0.0
    %1833 = vmatpush1.msra.mxu0 0.0
    %1834 = vmatprep.subr.mxu0 0.0
    %1835 = vmatpush1.msra.mxu0 0.0
    %1836 = vmatprep.subr.mxu0 0.0
    %1837 = vmatpush1.msra.mxu0 0.0
    %1838 = vmatprep.subr.mxu0 0.0
    %1839 = vmatpush1.msra.mxu0 0.0
    %1840 = vmatprep.subr.mxu0 0.0
    %1841 = vmatpush1.msra.mxu0 0.0
    %1842 = vmatprep.subr.mxu0 0.0
    %1843 = vmatpush1.msra.mxu0 0.0
    %1844 = vmatprep.subr.mxu0 0.0
    %1845 = vmatpush1.msra.mxu0 0.0
    %1846 = vmatprep.subr.mxu0 0.0
    %1847 = vmatpush1.msra.mxu0 0.0
    %1848 = vmatprep.subr.mxu0 0.0
    %1849 = vmatpush1.msra.mxu0 0.0
    %1850 = vmatprep.mubr.f32.mxu0 0.0
    %1851 = vmatmul.mubr.f32.gmra.mrb[0].mxu0 %v1769
    %v1852 = vpop.f32.mrb[0].mxu0
    %v1853 = vadd.f32 %v1651, %v1852
    %v1854 = vpop.f32.mrb[0].mxu0
    %1855 = vdwg.mxu0
    %v1856 = vtanh.pop %v1853
    %v1857 = vsub.f32 %v1856, %v1408
    %v1858 = vmul.f32 %v1768, %v1857
    %v1859 = vadd.f32 %v1408, %v1858
    %v1861 = vcombine.high %v1859, %v1859
    %v1863 = vunpack.c.l.s4 1966171168
    %v1864 = vunpack.c.0.s8 %v1863
    %v1865 = vlaneseq
    %v1866 = vshrl.u32 %v1865, 7
    %v1867 = vsub.s32 %v1864, %v1866
    %v1868 = vrot.slane %v1859, %v1867
    %v1870 = vunpack.c.l.s4 1966171168
    %v1871 = vunpack.c.0.s8 %v1870
    %v1872 = vlaneseq
    %v1873 = vshrl.u32 %v1872, 7
    %v1874 = vsub.s32 %v1871, %v1873
    %v1875 = vrot.slane %v1861, %v1874
    %v1876 = vcombine.high %v1868, %v1868
    %v1877 = vcombine.high %v1875, %v1875
    %v1879 = vunpack.c.l.s4 1966171168
    %v1880 = vunpack.c.0.s8 %v1879
    %v1881 = vlaneseq
    %v1882 = vshrl.u32 %v1881, 7
    %v1883 = vsub.s32 %v1880, %v1882
    %v1884 = vrot.slane %v1868, %v1883
    %v1886 = vunpack.c.l.s4 1966171168
    %v1887 = vunpack.c.0.s8 %v1886
    %v1888 = vlaneseq
    %v1889 = vshrl.u32 %v1888, 7
    %v1890 = vsub.s32 %v1887, %v1889
    %v1891 = vrot.slane %v1875, %v1890
    %v1893 = vunpack.c.l.s4 1966171168
    %v1894 = vunpack.c.0.s8 %v1893
    %v1895 = vlaneseq
    %v1896 = vshrl.u32 %v1895, 7
    %v1897 = vsub.s32 %v1894, %v1896
    %v1898 = vrot.slane %v1876, %v1897
    %v1900 = vunpack.c.l.s4 1966171168
    %v1901 = vunpack.c.0.s8 %v1900
    %v1902 = vlaneseq
    %v1903 = vshrl.u32 %v1902, 7
    %v1904 = vsub.s32 %v1901, %v1903
    %v1905 = vrot.slane %v1877, %v1904
    %v1906 = vcombine.high %v1884, %v1884
    %v1907 = vcombine.high %v1891, %v1891
    %v1908 = vcombine.high %v1898, %v1898
    %v1909 = vcombine.high %v1905, %v1905
    %1918 = vst [vmem:[#allocation12 + $0x3] sm:$0x1] %v1884
    %1919 = vst [vmem:[#allocation12 + $0x7] sm:$0x1] %v1898
    %1920 = vst [vmem:[#allocation12 + $0xb] sm:$0x1] %v1906
    %1921 = vst [vmem:[#allocation12 + $0xf] sm:$0x1] %v1908
    %1922 = vst [vmem:[#allocation12 + $0x13] sm:$0x1] %v1891
    %1923 = vst [vmem:[#allocation12 + $0x17] sm:$0x1] %v1905
    %1924 = vst [vmem:[#allocation12 + $0x1b] sm:$0x1] %v1907
    %1925 = vst [vmem:[#allocation12 + $0x1f] sm:$0x1] %v1909
    %1926 = vst [vmem:[#allocation2] sm:$0xff] %v1859
    // Predicated region
    $region50: #{tpu_custom_call.1} parent=1 // pred_check
      _
    $region51: #{tpu_custom_call.1} parent=1 // pred_check_branch
      %1928 = sbr.rel (0) target = $region53
    $region52: #{tpu_custom_call.1} parent=1 // pred_region
      %s1930 = ssub.s32 512, 512
      %1931 = vsyncadd [#allocation5], %s1930
      %s1932 = sshll.u32 [#allocation12], 4
      %s1933 = int_to_ptr.vmem [resolvable:$true] %s1932
      %1938 = dma.vmem_to_hbm [thread:$0]  %s1933, 512, %s6, [#allocation5], 64, 64, 4
    $region53: #{tpu_custom_call.1} parent=1 // pred_fallthru
      _
    // Predicated region
    $region54: #{tpu_custom_call.1} parent=1 // pred_check
      _
    $region55: #{tpu_custom_call.1} parent=1 // pred_check_branch
      %1940 = sbr.rel (0) target = $region57
    $region56: #{tpu_custom_call.1} parent=1 // pred_region
      %1941 = dma.done [#allocation5], 512
    $region57: #{tpu_custom_call.1} parent=1 // pred_fallthru
      _
    %1942 = vsyncpa [#allocation4], 1
    %1943 = vsyncpa [#allocation7], 1
    %1944 = vsyncpa [#allocation10], 1
    %1945 = vsyncpa [#allocation5], 1

</llo_original>
